<compile_context>
chip_gen: v6e
topology: v6e:2x2x1
jax: 0.10.0
libtpu: 0.0.40
codegen_flags: <defaults>
</compile_context>

<pallas_src>
import math
import functools

import jax
import jax.numpy as jnp
from jax.experimental import pallas as pl
from jax.experimental.pallas import tpu as pltpu


def _round_up(v, m):
    return (v + m - 1) // m * m


def _effective_tiles(n, tm, tk):
    """Clamp tiles to the problem and keep >=2 row tiles for megacore."""
    tm = min(tm, _round_up(n, 8))
    tk = min(tk, _round_up(n, 128))
    # Prefer at least two row tiles so the "parallel" axis can shard across
    # the two TensorCores on v7x (and keeps >1 outstanding output DMA).
    while tm > 256 and pl.cdiv(n, tm) < 2:
        tm //= 2
    n_rows = _round_up(n, tm)
    n_cols = _round_up(n, tk)
    return tm, tk, n_rows, n_cols


def prepare_adjacency(adj, *, tm=512, tk=512, compute_dtype=jnp.bfloat16):
    """Pad + cast the dense adjacency once so per-layer calls reuse it."""
    n = adj.shape[0]
    assert adj.shape == (n, n)
    _, _, n_rows, n_cols = _effective_tiles(n, tm, tk)
    return jnp.pad(adj, ((0, n_rows - n), (0, n_cols - n))).astype(compute_dtype)


def _gcn_kernel(adj_ref, x_ref, h0_ref, w_ref, *rest,
                alpha, theta, variant, residual, f_pad, tk, x_resident,
                compute_dtype):
    if residual:
        xres_ref, out_ref, acc_ref = rest
    else:
        out_ref, acc_ref = rest
        xres_ref = None

    k = pl.program_id(1)

    # --- partial hi = adj[i, k] @ x[k, :]  (bf16 MXU, f32 accumulate) --------
    if x_resident:
        start = pl.multiple_of(k * tk, tk)
        x_blk = x_ref[pl.ds(start, tk), :]
    else:
        x_blk = x_ref[...]
    partial = jnp.dot(adj_ref[...], x_blk, preferred_element_type=jnp.float32)

    @pl.when(k == 0)
    def _():
        acc_ref[...] = partial          # first step: plain store, no zero-init

    @pl.when(k > 0)
    def _():
        acc_ref[...] += partial

    # --- finalize: blend, second matmul, store --------------------------------
    @pl.when(k == pl.num_programs(1) - 1)
    def _():
        hi = acc_ref[...]                               # f32 [tm, f_pad]
        h0 = h0_ref[...].astype(jnp.float32)            # f32 [tm, f_pad]
        r = (1.0 - alpha) * hi + alpha * h0             # f32 [tm, f_pad]

        if variant:
            # support = concat([hi, h0], 1); support @ W == hi@W[:F] + h0@W[F:]
            sW = jnp.dot(hi.astype(compute_dtype), w_ref[:f_pad, :],
                         preferred_element_type=jnp.float32)
            sW = sW + jnp.dot(h0.astype(compute_dtype), w_ref[f_pad:, :],
                              preferred_element_type=jnp.float32)
        else:
            # support == r ; cast down once for the MXU
            sW = jnp.dot(r.astype(compute_dtype), w_ref[...],
                         preferred_element_type=jnp.float32)

        out = theta * sW + (1.0 - theta) * r
        if residual:
            out = out + xres_ref[...].astype(jnp.float32)
        out_ref[...] = out.astype(out_ref.dtype)


def graph_convolution(x, adj, h0, weight, *, lamda, alpha, l,
                      variant=False, residual=False,
                      tm=512, tk=512, compute_dtype=jnp.bfloat16):
    """Pallas forward pass of GraphConvolution.

    x      : [N, F]  node features
    adj    : [N, N]  dense normalized adjacency, OR the output of
             prepare_adjacency(adj) (padded, compute_dtype) reused across layers
    h0     : [N, F]  initial residual features
    weight : [F, out_features]  (or [2F, out_features] if variant)
    """
    theta = float(math.log(lamda / l + 1.0))
    alpha = float(alpha)
    n, f = x.shape
    out_features = weight.shape[1]
    assert h0.shape == (n, f)
    assert weight.shape[0] == (2 * f if variant else f)
    # The module's (1-theta)*r term (and the residual add) require this:
    assert out_features == f, "GraphConvolution requires out_features == in_features"

    tm, tk, n_rows, n_cols = _effective_tiles(n, tm, tk)
    f_pad = _round_up(f, 128)            # lane dim (features / out_features)
    itemsz = jnp.dtype(compute_dtype).itemsize

    # ---- adjacency: accept pre-prepared (padded + compute_dtype) or raw -----
    if adj.shape == (n_rows, n_cols):
        adj_p = adj.astype(compute_dtype)        # no-op if already prepared
    else:
        assert adj.shape == (n, n)
        adj_p = jnp.pad(adj, ((0, n_rows - n), (0, n_cols - n))).astype(compute_dtype)

    x_p = jnp.pad(x, ((0, n_cols - n), (0, f_pad - f))).astype(compute_dtype)
    h0_p = jnp.pad(h0, ((0, n_rows - n), (0, f_pad - f)))          # stays f32

    if variant:
        w_hi = jnp.pad(weight[:f], ((0, f_pad - f), (0, f_pad - out_features)))
        w_h0 = jnp.pad(weight[f:], ((0, f_pad - f), (0, f_pad - out_features)))
        w_p = jnp.concatenate([w_hi, w_h0], axis=0).astype(compute_dtype)
    else:
        w_p = jnp.pad(weight, ((0, f_pad - f),
                               (0, f_pad - out_features))).astype(compute_dtype)

    # ---- keep x fully VMEM-resident when small (kills the x re-stream) ------
    x_bytes = n_cols * f_pad * itemsz
    x_resident = x_bytes <= (4 << 20)
    if x_resident:
        x_spec = pl.BlockSpec((n_cols, f_pad), lambda i, k: (0, 0))
    else:
        x_spec = pl.BlockSpec((tk, f_pad), lambda i, k: (k, 0))

    in_specs = [
        pl.BlockSpec((tm, tk), lambda i, k: (i, k)),        # adj tile
        x_spec,                                             # x
        pl.BlockSpec((tm, f_pad), lambda i, k: (i, 0)),     # h0 (resident across k)
        pl.BlockSpec(w_p.shape, lambda i, k: (0, 0)),       # W  (resident)
    ]
    args = [adj_p, x_p, h0_p, w_p]
    if residual:
        xres_p = jnp.pad(x, ((0, n_rows - n), (0, f_pad - f)))     # f32 rows
        in_specs.append(pl.BlockSpec((tm, f_pad), lambda i, k: (i, 0)))
        args.append(xres_p)

    kernel = functools.partial(
        _gcn_kernel,
        alpha=alpha, theta=theta,
        variant=variant, residual=residual,
        f_pad=f_pad, tk=tk, x_resident=x_resident,
        compute_dtype=compute_dtype,
    )

    # ---- honest scheduler hints (ints!) --------------------------------------
    n_row_tiles = n_rows // tm
    out_itemsz = jnp.dtype(x.dtype).itemsize
    flops = 2 * n * n * f + 2 * n * weight.shape[0] * out_features
    x_stream_factor = 1 if x_resident else n_row_tiles
    bytes_accessed = (adj_p.size * itemsz
                      + x_p.size * itemsz * x_stream_factor
                      + h0_p.size * 4
                      + w_p.size * itemsz
                      + n_rows * f_pad * out_itemsz
                      + (n_rows * f_pad * 4 if residual else 0))

    # ---- VMEM budget computed from actual buffers (v7x-safe, <= 32 MiB) -----
    vmem_bytes = (2 * tm * tk * itemsz                                   # adj (dbl buf)
                  + (x_bytes if x_resident else 2 * tk * f_pad * itemsz)  # x
                  + 2 * tm * f_pad * 4                                   # h0
                  + 2 * w_p.shape[0] * f_pad * itemsz                    # W
                  + 2 * tm * f_pad * out_itemsz                          # out
                  + (2 * tm * f_pad * 4 if residual else 0)              # x residual
                  + tm * f_pad * 4)                                      # acc scratch
    vmem_limit = min(max(int(vmem_bytes * 2) + (2 << 20), 8 << 20), 32 << 20)

    out_p = pl.pallas_call(
        kernel,
        out_shape=jax.ShapeDtypeStruct((n_rows, f_pad), x.dtype),
        grid_spec=pltpu.PrefetchScalarGridSpec(
            num_scalar_prefetch=0,
            grid=(n_row_tiles, n_cols // tk),
            in_specs=in_specs,
            out_specs=pl.BlockSpec((tm, f_pad), lambda i, k: (i, 0)),
            scratch_shapes=[pltpu.VMEM((tm, f_pad), jnp.float32)],
        ),
        compiler_params=pltpu.CompilerParams(
            dimension_semantics=("parallel", "arbitrary"),
            vmem_limit_bytes=vmem_limit,
        ),
        cost_estimate=pl.CostEstimate(
            flops=int(flops), transcendentals=0,
            bytes_accessed=int(bytes_accessed)),
    )(*args)

    return out_p[:n, :out_features]


def graph_convolution_ref(x, adj, h0, weight, *, lamda, alpha, l,
                          variant=False, residual=False):
    theta = math.log(lamda / l + 1.0)
    hi = adj @ x
    if variant:
        support = jnp.concatenate([hi, h0], axis=1)
        r = (1.0 - alpha) * hi + alpha * h0
    else:
        support = (1.0 - alpha) * hi + alpha * h0
        r = support
    out = theta * (support @ weight) + (1.0 - theta) * r
    if residual:
        out = out + x
    return out


if __name__ == "__main__":
    # Small but multi-tile shapes: N nodes (2 row tiles after clamping), F features.
    N, F = 512, 128
    out_features = F
    lamda, alpha, l = 0.5, 0.1, 1.0

    key = jax.random.PRNGKey(0)
    kx, ka, kh, kw, kw2 = jax.random.split(key, 5)

    x = jax.random.normal(kx, (N, F), dtype=jnp.float32)
    h0 = jax.random.normal(kh, (N, F), dtype=jnp.float32)

    # Row-normalized dense "adjacency" (stand-in for the sparse spmm operand).
    adj_raw = (jax.random.uniform(ka, (N, N)) > 0.9).astype(jnp.float32)
    adj_raw = adj_raw + jnp.eye(N, dtype=jnp.float32)
    adj = adj_raw / jnp.sum(adj_raw, axis=1, keepdims=True)

    # Pad + bf16-cast the adjacency ONCE; reused by every layer/call below.
    adj_prepared = prepare_adjacency(adj)

    # reset_parameters(): uniform(-stdv, stdv), stdv = 1/sqrt(out_features).
    stdv = 1.0 / math.sqrt(out_features)
    weight = jax.random.uniform(kw, (F, out_features),
                                minval=-stdv, maxval=stdv, dtype=jnp.float32)
    weight_var = jax.random.uniform(kw2, (2 * F, out_features),
                                    minval=-stdv, maxval=stdv, dtype=jnp.float32)

    # ---- default path: variant=False, residual=False ------------------------
    out = graph_convolution(x, adj_prepared, h0, weight,
                            lamda=lamda, alpha=alpha, l=l,
                            variant=False, residual=False)
    out = jax.block_until_ready(out)
    ref = graph_convolution_ref(x, adj, h0, weight,
                                lamda=lamda, alpha=alpha, l=l,
                                variant=False, residual=False)
    assert out.shape == (N, out_features)
    assert jnp.allclose(out, ref, rtol=3e-2, atol=2e-2), "mismatch (default path)"

    # ---- variant=True, residual=True path (split-dot, no concatenate) -------
    out_v = graph_convolution(x, adj_prepared, h0, weight_var,
                              lamda=lamda, alpha=alpha, l=l,
                              variant=True, residual=True)
    out_v = jax.block_until_ready(out_v)
    ref_v = graph_convolution_ref(x, adj, h0, weight_var,
                                  lamda=lamda, alpha=alpha, l=l,
                                  variant=True, residual=True)
    assert out_v.shape == (N, out_features)
    assert jnp.allclose(out_v, ref_v, rtol=3e-2, atol=2e-2), "mismatch (variant path)"

    print("KERNEL_OK")
</pallas_src>

<mosaic_0001>
module attributes {stable_mosaic.version = 11 : i64} {
  func.func @_gcn_kernel(%arg0: i32, %arg1: i32, %arg2: memref<256x512xbf16, #tpu.memory_space<vmem>>, %arg3: memref<512x128xbf16, #tpu.memory_space<vmem>>, %arg4: memref<256x128xf32, #tpu.memory_space<vmem>>, %arg5: memref<128x128xbf16, #tpu.memory_space<vmem>>, %arg6: memref<256x128xf32, #tpu.memory_space<vmem>>, %arg7: memref<256x128xf32, #tpu.memory_space<vmem>>) attributes {dimension_semantics = [#tpu.dimension_semantics<parallel>, #tpu.dimension_semantics<arbitrary>], iteration_bounds = array<i64: 2, 1>, scalar_prefetch = 0 : i64, scratch_operands = 1 : i64, tpu.core_type = #tpu.core_type<tc>, window_params = [{transform_indices = @transform_0, window_bounds = array<i64: 256, 512>}, {pipeline_mode = #tpu.pipeline_mode<synchronous>, transform_indices = @transform_1, window_bounds = array<i64: 512, 128>}, {transform_indices = @transform_2, window_bounds = array<i64: 256, 128>}, {pipeline_mode = #tpu.pipeline_mode<synchronous>, transform_indices = @transform_3, window_bounds = array<i64: 128, 128>}, {transform_indices = @transform_4, window_bounds = array<i64: 256, 128>}]} {
    %c512_i32 = arith.constant 512 : i32
    %0 = arith.muli %arg1, %c512_i32 : i32
    %1 = tpu.assume_multiple %0, 512 : i32
    %2 = arith.index_cast %1 : i32 to index
    %c0 = arith.constant 0 : index
    %3 = vector.load %arg3[%2, %c0] : memref<512x128xbf16, #tpu.memory_space<vmem>>, vector<512x128xbf16>
    %c0_0 = arith.constant 0 : index
    %c0_1 = arith.constant 0 : index
    %4 = vector.load %arg2[%c0_0, %c0_1] : memref<256x512xbf16, #tpu.memory_space<vmem>>, vector<256x512xbf16>
    %cst = arith.constant dense<0.000000e+00> : vector<256x128xf32>
    %5 = tpu.matmul %4, %3, %cst {dimension_numbers = #tpu.dot_dimension_numbers<[1], [0], [0], [1], [0, 0, 1, 1], [], []>} : vector<256x512xbf16>, vector<512x128xbf16>, vector<256x128xf32> -> vector<256x128xf32>
    %c0_i32 = arith.constant 0 : i32
    %6 = arith.cmpi eq, %arg1, %c0_i32 : i32
    %7 = arith.extui %6 : i1 to i32
    %c0_i32_2 = arith.constant 0 : i32
    %8 = arith.cmpi ne, %7, %c0_i32_2 : i32
    scf.if %8 {
      %c0_7 = arith.constant 0 : index
      %c0_8 = arith.constant 0 : index
      %15 = vector.load %arg7[%c0_7, %c0_8] : memref<256x128xf32, #tpu.memory_space<vmem>>, vector<256x128xf32>
      tpu.vector_store %arg7[%c0_7, %c0_8], %5 {strides = array<i32>} : memref<256x128xf32, #tpu.memory_space<vmem>>, vector<256x128xf32>,
    } else {
    }
    %c0_i32_3 = arith.constant 0 : i32
    %9 = arith.cmpi sgt, %arg1, %c0_i32_3 : i32
    %10 = arith.extui %9 : i1 to i32
    %c0_i32_4 = arith.constant 0 : i32
    %11 = arith.cmpi ne, %10, %c0_i32_4 : i32
    scf.if %11 {
      %c0_7 = arith.constant 0 : index
      %c0_8 = arith.constant 0 : index
      %15 = vector.load %arg7[%c0_7, %c0_8] : memref<256x128xf32, #tpu.memory_space<vmem>>, vector<256x128xf32>
      %16 = arith.addf %15, %5 : vector<256x128xf32>
      %c0_9 = arith.constant 0 : index
      %c0_10 = arith.constant 0 : index
      %17 = vector.load %arg7[%c0_9, %c0_10] : memref<256x128xf32, #tpu.memory_space<vmem>>, vector<256x128xf32>
      tpu.vector_store %arg7[%c0_9, %c0_10], %16 {strides = array<i32>} : memref<256x128xf32, #tpu.memory_space<vmem>>, vector<256x128xf32>,
    } else {
    }
    %c0_i32_5 = arith.constant 0 : i32
    %12 = arith.cmpi eq, %arg1, %c0_i32_5 : i32
    %13 = arith.extui %12 : i1 to i32
    %c0_i32_6 = arith.constant 0 : i32
    %14 = arith.cmpi ne, %13, %c0_i32_6 : i32
    scf.if %14 {
      %c0_7 = arith.constant 0 : index
      %c0_8 = arith.constant 0 : index
      %15 = vector.load %arg7[%c0_7, %c0_8] : memref<256x128xf32, #tpu.memory_space<vmem>>, vector<256x128xf32>
      %c0_9 = arith.constant 0 : index
      %c0_10 = arith.constant 0 : index
      %16 = vector.load %arg4[%c0_9, %c0_10] : memref<256x128xf32, #tpu.memory_space<vmem>>, vector<256x128xf32>
      %cst_11 = arith.constant 0.899999976 : f32
      %17 = vector.broadcast %cst_11 : f32 to vector<256x128xf32>
      %18 = arith.mulf %17, %15 : vector<256x128xf32>
      %cst_12 = arith.constant 1.000000e-01 : f32
      %19 = vector.broadcast %cst_12 : f32 to vector<256x128xf32>
      %20 = arith.mulf %19, %16 : vector<256x128xf32>
      %21 = arith.addf %18, %20 : vector<256x128xf32>
      %22 = arith.truncf %21 : vector<256x128xf32> to vector<256x128xbf16>
      %c0_13 = arith.constant 0 : index
      %c0_14 = arith.constant 0 : index
      %23 = vector.load %arg5[%c0_13, %c0_14] : memref<128x128xbf16, #tpu.memory_space<vmem>>, vector<128x128xbf16>
      %cst_15 = arith.constant dense<0.000000e+00> : vector<256x128xf32>
      %24 = tpu.matmul %22, %23, %cst_15 {dimension_numbers = #tpu.dot_dimension_numbers<[1], [0], [0], [1], [0, 0, 1, 1], [], []>} : vector<256x128xbf16>, vector<128x128xbf16>, vector<256x128xf32> -> vector<256x128xf32>
      %cst_16 = arith.constant 0.405465096 : f32
      %25 = vector.broadcast %cst_16 : f32 to vector<256x128xf32>
      %26 = arith.mulf %25, %24 : vector<256x128xf32>
      %cst_17 = arith.constant 0.594534874 : f32
      %27 = vector.broadcast %cst_17 : f32 to vector<256x128xf32>
      %28 = arith.mulf %27, %21 : vector<256x128xf32>
      %29 = arith.addf %26, %28 : vector<256x128xf32>
      %c0_18 = arith.constant 0 : index
      %c0_19 = arith.constant 0 : index
      %30 = vector.load %arg6[%c0_18, %c0_19] : memref<256x128xf32, #tpu.memory_space<vmem>>, vector<256x128xf32>
      tpu.vector_store %arg6[%c0_18, %c0_19], %29 {strides = array<i32>} : memref<256x128xf32, #tpu.memory_space<vmem>>, vector<256x128xf32>,
    } else {
    }
    return
  }
  func.func @transform_0(%arg0: i32, %arg1: i32) -> (i32, i32) {
    %c0_i32 = arith.constant 0 : i32
    return %arg0, %arg1 : i32, i32
  }
  func.func @transform_1(%arg0: i32, %arg1: i32) -> (i32, i32) {
    %c0_i32 = arith.constant 0 : i32
    %c0_i32_0 = arith.constant 0 : i32
    %c0_i32_1 = arith.constant 0 : i32
    return %c0_i32, %c0_i32_0 : i32, i32
  }
  func.func @transform_2(%arg0: i32, %arg1: i32) -> (i32, i32) {
    %c0_i32 = arith.constant 0 : i32
    %c0_i32_0 = arith.constant 0 : i32
    return %arg0, %c0_i32 : i32, i32
  }
  func.func @transform_3(%arg0: i32, %arg1: i32) -> (i32, i32) {
    %c0_i32 = arith.constant 0 : i32
    %c0_i32_0 = arith.constant 0 : i32
    %c0_i32_1 = arith.constant 0 : i32
    return %c0_i32, %c0_i32_0 : i32, i32
  }
  func.func @transform_4(%arg0: i32, %arg1: i32) -> (i32, i32) {
    %c0_i32 = arith.constant 0 : i32
    %c0_i32_0 = arith.constant 0 : i32
    return %arg0, %c0_i32 : i32, i32
  }
}

</mosaic_0001>

<llo_original>
// kernel: tpu_custom_call.1
$region0: #{tpu_custom_call.1}
  #allocation0 [shape = 'u32[]', space=smem, size = 0x4, offset = 0x4, fixed_abs, tag = 'smem constant byte address 0x4 - core index']
  #allocation1 [shape = 'u32[144,128]{1,0:T(1,128)}', space=vmem, size = 0x12000, scoped, tag = 'internal scratch']
  #allocation2 [shape = 'f32[256,128]{1,0:T(8,128)}', space=vmem, size = 0x20000, scoped, tag = 'scratch operand']
  %s0 = inlined_call_operand.hbm [shape: bf16[512,512], index: 0, kind: input, shape index: {}]
  %s1 = inlined_call_operand.hbm [shape: bf16[512,128], index: 1, kind: input, shape index: {}]
  %s2 = inlined_call_operand.hbm [shape: f32[512,128], index: 2, kind: input, shape index: {}]
  %s3 = inlined_call_operand.hbm [shape: bf16[128,128], index: 3, kind: input, shape index: {}]
  %s4 = inlined_call_operand.hbm [shape: f32[512,128], index: 4, kind: output, shape index: {}]
  %s5 = sld [smem:[#allocation0]]
  $region77: #{tpu_custom_call.1} parent=0
    _
  %s7 = ssub.s32 1, %s5
  %s8 = scalar_select 0, %s7, %s5
  $region1: #{tpu_custom_call.1} parent=0
    #allocation3 [shape = 'u8[524288]{0}', space=vmem, size = 0x80000, scoped, tag = 'input window, operand 0']
    #allocation4 [shape = 's32[2]{0}', space=sflag, size = 0x8, scoped, tag = 'scoped memory for tpu_custom_call.1']
    #allocation5 [shape = 's32[2]{0}', space=sflag, size = 0x8, scoped, tag = 'scoped memory for tpu_custom_call.1']
    #allocation6 [shape = 'u8[131072]{0}', space=vmem, size = 0x20000, scoped, tag = 'input window, operand 1, single buffered']
    #allocation7 [shape = 's32[1]{0}', space=sflag, size = 0x4, scoped, tag = 'scoped memory for tpu_custom_call.1']
    #allocation8 [shape = 'u8[262144]{0}', space=vmem, size = 0x40000, scoped, tag = 'input window, operand 2']
    #allocation9 [shape = 'u8[32768]{0}', space=vmem, size = 0x8000, scoped, tag = 'input window, operand 3, single buffered']
    #allocation10 [shape = 'u8[262144]{0}', space=vmem, size = 0x40000, scoped, tag = 'output window, operand 0']
    %9 = vsyncpa [#allocation4], 0
    %s10 = scalar_lea.sflag [#allocation4], 1
    %11 = vsyncpa %s10, 0
    %12 = vsyncpa [#allocation7], 0
    %13 = vsyncpa [#allocation5], 0
    %s14 = scalar_lea.sflag [#allocation5], 1
    %15 = vsyncpa %s14, 0
    loop: start=0, step=1, limit=4
    $region2: #{tpu_custom_call.1} parent=1 // loop_pre_header
      _
    $region3: #{tpu_custom_call.1} parent=1 // loop_header
      %s17 = sphi 0, %s21
      %p18 = scmp.ge.s32.totalorder %s17, 4
      %s24 = sphi 0, %s36
      %s25 = sphi 0, %s32
      %s26 = sphi 0, %s24
      %s27 = sphi 0, %s25
      %s28 = sphi 0, %s26
      %s29 = sphi 0, %s27
      %s41 = sphi 0, %s43
      %s44 = sphi 0, %s41
      %s45 = sphi 0, %s44
      %s61 = sphi 0, %s45
      %s65 = sphi 0, %s65
      %s67 = sphi 0, %s65
      %s68 = sphi 0, %s67
      %s82 = sphi 0, %s68
      %s88 = sphi 0, %s90
      %s91 = sphi 0, %s88
      %s92 = sphi 0, %s91
      %s108 = sphi 0, %s92
      %s112 = sphi 0, %s112
      %s114 = sphi 0, %s112
      %s115 = sphi 0, %s114
      %s129 = sphi 0, %s115
      %s135 = sphi 0, %s137
      %s138 = sphi 0, %s135
      %s139 = sphi 0, %s138
      %s155 = sphi 0, %s139
    $region4: #{tpu_custom_call.1} parent=1 // loop_header_branch
      %20 = sbr.rel (%p18) target = $region8
    $region5: #{tpu_custom_call.1} parent=1 // loop_body
      %s22 = ssub.s32 %s17, 1
      %s23 = ssub.s32 %s17, 2
      %s30 = sadd.s32 1, %s25
      %p31 = scmp.ge.s32.totalorder %s30, 1
      %s32 = scalar_select %p31, 0, %s30
      %s33 = sadd.s32 1, %s24
      %s34 = scalar_select %p31, %s33, %s24
      %p35 = scmp.ge.s32.totalorder %s34, 2
      %s36 = scalar_select %p35, 0, %s34
      %s37 = ssub.s32 %s24, %s36
      %s38 = ssub.s32 %s25, %s32
      %s39 = sor.u32 %s37, %s38
      %p40 = scmp.eq.s32.totalorder %s39, 0
      %s42 = sadd.s32 %s41, 1
      %s43 = scalar_select %p40, %s41, %s42
      %p46 = pneg %p40
      %p47 = scmp.eq.s32.totalorder %s17, 1
      %p48 = por %p46, %p47
      %p49 = scmp.ne.s32.totalorder %s41, %s44
      %p50 = scmp.eq.s32.totalorder %s17, 0
      %p51 = por %p49, %p50
      %p52 = scmp.ne.s32.totalorder %s41, %s44
      %p53 = scmp.eq.s32.totalorder %s22, 1
      %p54 = por %p52, %p53
      %p55 = scmp.ne.s32.totalorder %s44, %s45
      %p56 = scmp.eq.s32.totalorder %s22, 0
      %p57 = por %p55, %p56
      %p58 = scmp.ne.s32.totalorder %s44, %s45
      %p59 = scmp.eq.s32.totalorder %s23, 1
      %p60 = por %p58, %p59
      %p62 = scmp.ne.s32.totalorder %s45, %s61
      %p63 = scmp.eq.s32.totalorder %s23, 0
      %p64 = por %p62, %p63
      %s66 = sadd.s32 %s65, 1
      %p69 = scmp.eq.s32.totalorder %s17, 1
      %p70 = scmp.ne.s32.totalorder %s65, %s67
      %p71 = scmp.eq.s32.totalorder %s17, 0
      %p72 = por %p70, %p71
      %p73 = scmp.ne.s32.totalorder %s65, %s67
      %p74 = scmp.eq.s32.totalorder %s22, 1
      %p75 = por %p73, %p74
      %p76 = scmp.ne.s32.totalorder %s67, %s68
      %p77 = scmp.eq.s32.totalorder %s22, 0
      %p78 = por %p76, %p77
      %p79 = scmp.ne.s32.totalorder %s67, %s68
      %p80 = scmp.eq.s32.totalorder %s23, 1
      %p81 = por %p79, %p80
      %p83 = scmp.ne.s32.totalorder %s68, %s82
      %p84 = scmp.eq.s32.totalorder %s23, 0
      %p85 = por %p83, %p84
      %s86 = ssub.s32 %s24, %s36
      %p87 = scmp.eq.s32.totalorder %s86, 0
      %s89 = sadd.s32 %s88, 1
      %s90 = scalar_select %p87, %s88, %s89
      %p93 = pneg %p87
      %p94 = scmp.eq.s32.totalorder %s17, 1
      %p95 = por %p93, %p94
      %p96 = scmp.ne.s32.totalorder %s88, %s91
      %p97 = scmp.eq.s32.totalorder %s17, 0
      %p98 = por %p96, %p97
      %p99 = scmp.ne.s32.totalorder %s88, %s91
      %p100 = scmp.eq.s32.totalorder %s22, 1
      %p101 = por %p99, %p100
      %p102 = scmp.ne.s32.totalorder %s91, %s92
      %p103 = scmp.eq.s32.totalorder %s22, 0
      %p104 = por %p102, %p103
      %p105 = scmp.ne.s32.totalorder %s91, %s92
      %p106 = scmp.eq.s32.totalorder %s23, 1
      %p107 = por %p105, %p106
      %p109 = scmp.ne.s32.totalorder %s92, %s108
      %p110 = scmp.eq.s32.totalorder %s23, 0
      %p111 = por %p109, %p110
      %s113 = sadd.s32 %s112, 1
      %p116 = scmp.eq.s32.totalorder %s17, 1
      %p117 = scmp.ne.s32.totalorder %s112, %s114
      %p118 = scmp.eq.s32.totalorder %s17, 0
      %p119 = por %p117, %p118
      %p120 = scmp.ne.s32.totalorder %s112, %s114
      %p121 = scmp.eq.s32.totalorder %s22, 1
      %p122 = por %p120, %p121
      %p123 = scmp.ne.s32.totalorder %s114, %s115
      %p124 = scmp.eq.s32.totalorder %s22, 0
      %p125 = por %p123, %p124
      %p126 = scmp.ne.s32.totalorder %s114, %s115
      %p127 = scmp.eq.s32.totalorder %s23, 1
      %p128 = por %p126, %p127
      %p130 = scmp.ne.s32.totalorder %s115, %s129
      %p131 = scmp.eq.s32.totalorder %s23, 0
      %p132 = por %p130, %p131
      %s133 = ssub.s32 %s24, %s36
      %p134 = scmp.eq.s32.totalorder %s133, 0
      %s136 = sadd.s32 %s135, 1
      %s137 = scalar_select %p134, %s135, %s136
      %p140 = pneg %p134
      %p141 = scmp.eq.s32.totalorder %s17, 1
      %p142 = por %p140, %p141
      %p143 = scmp.ne.s32.totalorder %s135, %s138
      %p144 = scmp.eq.s32.totalorder %s17, 0
      %p145 = por %p143, %p144
      %p146 = scmp.ne.s32.totalorder %s135, %s138
      %p147 = scmp.eq.s32.totalorder %s22, 1
      %p148 = por %p146, %p147
      %p149 = scmp.ne.s32.totalorder %s138, %s139
      %p150 = scmp.eq.s32.totalorder %s22, 0
      %p151 = por %p149, %p150
      %p152 = scmp.ne.s32.totalorder %s138, %s139
      %p153 = scmp.eq.s32.totalorder %s23, 1
      %p154 = por %p152, %p153
      %p156 = scmp.ne.s32.totalorder %s139, %s155
      %p157 = scmp.eq.s32.totalorder %s23, 0
      %p158 = por %p156, %p157
      %p159 = scmp.le.s32.totalorder 1, %s17
      %p160 = scmp.lt.s32.totalorder %s17, 3
      %p161 = pnand %p159, %p160
      %p162 = pneg %p161
      // Predicated region
      $region9: #{tpu_custom_call.1} parent=5 // pred_check
        _
      $region10: #{tpu_custom_call.1} parent=5 // pred_check_branch
        %164 = sbr.rel (%p161) target = $region12
      $region11: #{tpu_custom_call.1} parent=5 // pred_region
        %s165 = ssub.s32 %s17, 1
        // Predicated region
        $region13: #{tpu_custom_call.1} parent=11 // pred_check
          %p166 = pneg %p78
        $region14: #{tpu_custom_call.1} parent=11 // pred_check_branch
          %168 = sbr.rel (%p166) target = $region16
        $region15: #{tpu_custom_call.1} parent=11 // pred_region
          %s170 = ssub.s32 4096, 4096
          %171 = vsyncadd [#allocation7], %s170
          %s172 = sshll.u32 [#allocation6], 4
          %s173 = int_to_ptr.vmem [resolvable:$true] %s172
          %178 = dma.hbm_to_vmem [thread:$0]  %s1, 4096, %s173, [#allocation7], 64, 64, 4
        $region16: #{tpu_custom_call.1} parent=11 // pred_fallthru
          _
        // Predicated region
        $region17: #{tpu_custom_call.1} parent=11 // pred_check
          %p179 = pneg %p125
        $region18: #{tpu_custom_call.1} parent=11 // pred_check_branch
          %181 = sbr.rel (%p179) target = $region20
        $region19: #{tpu_custom_call.1} parent=11 // pred_region
          %s183 = ssub.s32 1024, 1024
          %184 = vsyncadd [#allocation7], %s183
          %s185 = sshll.u32 [#allocation9], 4
          %s186 = int_to_ptr.vmem [resolvable:$true] %s185
          %191 = dma.hbm_to_vmem [thread:$0]  %s3, 1024, %s186, [#allocation7], 64, 64, 4
        $region20: #{tpu_custom_call.1} parent=11 // pred_fallthru
          _
      $region12: #{tpu_custom_call.1} parent=5 // pred_fallthru
        _
      %p192 = scmp.lt.s32.totalorder %s17, 2
      // Predicated region
      $region21: #{tpu_custom_call.1} parent=5 // pred_check
        %p193 = pneg %p192
      $region22: #{tpu_custom_call.1} parent=5 // pred_check_branch
        %195 = sbr.rel (%p193) target = $region24
      $region23: #{tpu_custom_call.1} parent=5 // pred_region
        // Predicated region
        $region25: #{tpu_custom_call.1} parent=23 // pred_check
          %p196 = pneg %p51
        $region26: #{tpu_custom_call.1} parent=23 // pred_check_branch
          %198 = sbr.rel (%p196) target = $region28
        $region27: #{tpu_custom_call.1} parent=23 // pred_region
          %s199 = sand.u32 %s17, 1
          %s200 = scalar_lea.sflag [#allocation4], %s199
          %s201 = sand.u32 %s41, 1
          %s202 = smul.addr %s201, 512
          %s203 = scalar_lea.vmem [#allocation3], %s202
          %s204 = smul.u32 32, %s24
          %s205 = smul.u32 4, %s25
          %s207 = ssub.s32 8192, 8192
          %208 = vsyncadd %s200, %s207
          %s209 = smul.addr %s204, 4
          %s210 = sadd.s32 %s205, %s209
          %s211 = smul.addr %s210, 64
          %s212 = scalar_lea.hbm %s0, %s211
          %s213 = sshll.u32 %s203, 4
          %s214 = int_to_ptr.vmem [resolvable:$true] %s213
          %219 = dma.hbm_to_vmem [thread:$0]  %s212, 8192, %s214, %s200, 256, 256, 16
        $region28: #{tpu_custom_call.1} parent=23 // pred_fallthru
          _
        // Predicated region
        $region29: #{tpu_custom_call.1} parent=23 // pred_check
          %p220 = pneg %p98
        $region30: #{tpu_custom_call.1} parent=23 // pred_check_branch
          %222 = sbr.rel (%p220) target = $region32
        $region31: #{tpu_custom_call.1} parent=23 // pred_region
          %s223 = sand.u32 %s17, 1
          %s224 = scalar_lea.sflag [#allocation4], %s223
          %s225 = sand.u32 %s88, 1
          %s226 = smul.addr %s225, 256
          %s227 = scalar_lea.vmem [#allocation8], %s226
          %s228 = smul.u32 32, %s24
          %s230 = ssub.s32 4096, 4096
          %231 = vsyncadd %s224, %s230
          %s232 = smul.addr %s228, 128
          %s233 = scalar_lea.hbm %s2, %s232
          %s234 = sshll.u32 %s227, 4
          %s235 = int_to_ptr.vmem [resolvable:$true] %s234
          %240 = dma.hbm_to_vmem [thread:$0]  %s233, 4096, %s235, %s224, 128, 128, 8
        $region32: #{tpu_custom_call.1} parent=23 // pred_fallthru
          _
      $region24: #{tpu_custom_call.1} parent=5 // pred_fallthru
        _
      %p241 = scmp.le.s32.totalorder 1, %s17
      %p242 = scmp.lt.s32.totalorder %s17, 3
      %p243 = pnand %p241, %p242
      %p244 = pneg %p243
      // Predicated region
      $region33: #{tpu_custom_call.1} parent=5 // pred_check
        _
      $region34: #{tpu_custom_call.1} parent=5 // pred_check_branch
        %246 = sbr.rel (%p243) target = $region36
      $region35: #{tpu_custom_call.1} parent=5 // pred_region
        %s247 = ssub.s32 %s17, 1
        %s248 = sand.u32 %s22, 1
        %s249 = scalar_lea.sflag [#allocation4], %s248
        %s250 = sand.u32 %s44, 1
        %s251 = smul.addr %s250, 512
        %s252 = scalar_lea.vmem [#allocation3], %s251
        // Predicated region
        $region37: #{tpu_custom_call.1} parent=35 // pred_check
          %p253 = pneg %p57
        $region38: #{tpu_custom_call.1} parent=35 // pred_check_branch
          %255 = sbr.rel (%p253) target = $region40
        $region39: #{tpu_custom_call.1} parent=35 // pred_region
          %256 = dma.done %s249, 8192
        $region40: #{tpu_custom_call.1} parent=35 // pred_fallthru
          _
        // Predicated region
        $region41: #{tpu_custom_call.1} parent=35 // pred_check
          %p257 = pneg %p78
        $region42: #{tpu_custom_call.1} parent=35 // pred_check_branch
          %259 = sbr.rel (%p257) target = $region44
        $region43: #{tpu_custom_call.1} parent=35 // pred_region
          %260 = dma.done [#allocation7], 4096
        $region44: #{tpu_custom_call.1} parent=35 // pred_fallthru
          _
        %s261 = sand.u32 %s22, 1
        %s262 = scalar_lea.sflag [#allocation4], %s261
        %s263 = sand.u32 %s91, 1
        %s264 = smul.addr %s263, 256
        %s265 = scalar_lea.vmem [#allocation8], %s264
        // Predicated region
        $region45: #{tpu_custom_call.1} parent=35 // pred_check
          %p266 = pneg %p104
        $region46: #{tpu_custom_call.1} parent=35 // pred_check_branch
          %268 = sbr.rel (%p266) target = $region48
        $region47: #{tpu_custom_call.1} parent=35 // pred_region
          %269 = dma.done %s262, 4096
        $region48: #{tpu_custom_call.1} parent=35 // pred_fallthru
          _
        // Predicated region
        $region49: #{tpu_custom_call.1} parent=35 // pred_check
          %p270 = pneg %p125
        $region50: #{tpu_custom_call.1} parent=35 // pred_check_branch
          %272 = sbr.rel (%p270) target = $region52
        $region51: #{tpu_custom_call.1} parent=35 // pred_region
          %273 = dma.done [#allocation7], 1024
        $region52: #{tpu_custom_call.1} parent=35 // pred_fallthru
          _
        %s274 = sand.u32 %s22, 1
        %s275 = scalar_lea.sflag [#allocation4], %s274
        %s276 = sand.u32 %s44, 1
        %s277 = smul.addr %s276, 512
        %s278 = scalar_lea.vmem [#allocation3], %s277
        %p279 = pneg %p57
        %p280 = pneg %p54
        %p281 = pneg %p78
        %p282 = pneg %p75
        %s283 = sand.u32 %s22, 1
        %s284 = scalar_lea.sflag [#allocation4], %s283
        %s285 = sand.u32 %s91, 1
        %s286 = smul.addr %s285, 256
        %s287 = scalar_lea.vmem [#allocation8], %s286
        %p288 = pneg %p104
        %p289 = pneg %p101
        %p290 = pneg %p125
        %p291 = pneg %p122
        %p292 = pneg %p151
        %p293 = pneg %p148
        %s294 = sand.u32 %s138, 1
        %s295 = scalar_lea.sflag [#allocation5], %s294
        %s296 = sand.u32 %s138, 1
        %s297 = smul.addr %s296, 256
        %s298 = scalar_lea.vmem [#allocation10], %s297
        %s299 = smul.u32 32, %s26
        %s300 = smul.u32 4, %s27
        %s301 = smul.u32 32, %s26
        %s302 = smul.u32 32, %s26
        %s304 = smul.u32 %s27, 512
        %s305 = sshra.s32 %s304, 3
        %s306 = sand.u32 %s304, 7
        %s307 = smul.addr %s305, 4
        %s308 = scalar_lea.vmem [#allocation6], %s307
        %v309 = vld [vmem:[%s308] sm:$0xf]
        %v310 = vld [vmem:[%s308 + $0x4] sm:$0xf]
        %v311 = vld [vmem:[%s308 + $0x8] sm:$0xf]
        %v312 = vld [vmem:[%s308 + $0xc] sm:$0xf]
        %v313 = vld [vmem:[%s308 + $0x10] sm:$0xf]
        %v314 = vld [vmem:[%s308 + $0x14] sm:$0xf]
        %v315 = vld [vmem:[%s308 + $0x18] sm:$0xf]
        %v316 = vld [vmem:[%s308 + $0x1c] sm:$0xf]
        %v317 = vld [vmem:[%s308 + $0x20] sm:$0xf]
        %v318 = vld [vmem:[%s308 + $0x24] sm:$0xf]
        %v319 = vld [vmem:[%s308 + $0x28] sm:$0xf]
        %v320 = vld [vmem:[%s308 + $0x2c] sm:$0xf]
        %v321 = vld [vmem:[%s308 + $0x30] sm:$0xf]
        %v322 = vld [vmem:[%s308 + $0x34] sm:$0xf]
        %v323 = vld [vmem:[%s308 + $0x38] sm:$0xf]
        %v324 = vld [vmem:[%s308 + $0x3c] sm:$0xf]
        %v325 = vld [vmem:[%s308 + $0x40] sm:$0xf]
        %v326 = vld [vmem:[%s308 + $0x44] sm:$0xf]
        %v327 = vld [vmem:[%s308 + $0x48] sm:$0xf]
        %v328 = vld [vmem:[%s308 + $0x4c] sm:$0xf]
        %v329 = vld [vmem:[%s308 + $0x50] sm:$0xf]
        %v330 = vld [vmem:[%s308 + $0x54] sm:$0xf]
        %v331 = vld [vmem:[%s308 + $0x58] sm:$0xf]
        %v332 = vld [vmem:[%s308 + $0x5c] sm:$0xf]
        %v333 = vld [vmem:[%s308 + $0x60] sm:$0xf]
        %v334 = vld [vmem:[%s308 + $0x64] sm:$0xf]
        %v335 = vld [vmem:[%s308 + $0x68] sm:$0xf]
        %v336 = vld [vmem:[%s308 + $0x6c] sm:$0xf]
        %v337 = vld [vmem:[%s308 + $0x70] sm:$0xf]
        %v338 = vld [vmem:[%s308 + $0x74] sm:$0xf]
        %v339 = vld [vmem:[%s308 + $0x78] sm:$0xf]
        %v340 = vld [vmem:[%s308 + $0x7c] sm:$0xf]
        %v341 = vld [vmem:[%s308 + $0x80] sm:$0xf]
        %v342 = vld [vmem:[%s308 + $0x84] sm:$0xf]
        %v343 = vld [vmem:[%s308 + $0x88] sm:$0xf]
        %v344 = vld [vmem:[%s308 + $0x8c] sm:$0xf]
        %v345 = vld [vmem:[%s308 + $0x90] sm:$0xf]
        %v346 = vld [vmem:[%s308 + $0x94] sm:$0xf]
        %v347 = vld [vmem:[%s308 + $0x98] sm:$0xf]
        %v348 = vld [vmem:[%s308 + $0x9c] sm:$0xf]
        %v349 = vld [vmem:[%s308 + $0xa0] sm:$0xf]
        %v350 = vld [vmem:[%s308 + $0xa4] sm:$0xf]
        %v351 = vld [vmem:[%s308 + $0xa8] sm:$0xf]
        %v352 = vld [vmem:[%s308 + $0xac] sm:$0xf]
        %v353 = vld [vmem:[%s308 + $0xb0] sm:$0xf]
        %v354 = vld [vmem:[%s308 + $0xb4] sm:$0xf]
        %v355 = vld [vmem:[%s308 + $0xb8] sm:$0xf]
        %v356 = vld [vmem:[%s308 + $0xbc] sm:$0xf]
        %v357 = vld [vmem:[%s308 + $0xc0] sm:$0xf]
        %v358 = vld [vmem:[%s308 + $0xc4] sm:$0xf]
        %v359 = vld [vmem:[%s308 + $0xc8] sm:$0xf]
        %v360 = vld [vmem:[%s308 + $0xcc] sm:$0xf]
        %v361 = vld [vmem:[%s308 + $0xd0] sm:$0xf]
        %v362 = vld [vmem:[%s308 + $0xd4] sm:$0xf]
        %v363 = vld [vmem:[%s308 + $0xd8] sm:$0xf]
        %v364 = vld [vmem:[%s308 + $0xdc] sm:$0xf]
        %v365 = vld [vmem:[%s308 + $0xe0] sm:$0xf]
        %v366 = vld [vmem:[%s308 + $0xe4] sm:$0xf]
        %v367 = vld [vmem:[%s308 + $0xe8] sm:$0xf]
        %v368 = vld [vmem:[%s308 + $0xec] sm:$0xf]
        %v369 = vld [vmem:[%s308 + $0xf0] sm:$0xf]
        %v370 = vld [vmem:[%s308 + $0xf4] sm:$0xf]
        %v371 = vld [vmem:[%s308 + $0xf8] sm:$0xf]
        %v372 = vld [vmem:[%s308 + $0xfc] sm:$0xf]
        %v373 = vld [vmem:[%s252] sm:$0xff]
        %v374 = vld [vmem:[%s252 + $0x8] sm:$0xff]
        %v375 = vld [vmem:[%s252 + $0x10] sm:$0xff]
        %v376 = vld [vmem:[%s252 + $0x18] sm:$0xff]
        %v377 = vld [vmem:[%s252 + $0x20] sm:$0xff]
        %v378 = vld [vmem:[%s252 + $0x28] sm:$0xff]
        %v379 = vld [vmem:[%s252 + $0x30] sm:$0xff]
        %v380 = vld [vmem:[%s252 + $0x38] sm:$0xff]
        %v381 = vld [vmem:[%s252 + $0x40] sm:$0xff]
        %v382 = vld [vmem:[%s252 + $0x48] sm:$0xff]
        %v383 = vld [vmem:[%s252 + $0x50] sm:$0xff]
        %v384 = vld [vmem:[%s252 + $0x58] sm:$0xff]
        %v385 = vld [vmem:[%s252 + $0x60] sm:$0xff]
        %v386 = vld [vmem:[%s252 + $0x68] sm:$0xff]
        %v387 = vld [vmem:[%s252 + $0x70] sm:$0xff]
        %v388 = vld [vmem:[%s252 + $0x78] sm:$0xff]
        %v389 = vld [vmem:[%s252 + $0x80] sm:$0xff]
        %v390 = vld [vmem:[%s252 + $0x88] sm:$0xff]
        %v391 = vld [vmem:[%s252 + $0x90] sm:$0xff]
        %v392 = vld [vmem:[%s252 + $0x98] sm:$0xff]
        %v393 = vld [vmem:[%s252 + $0xa0] sm:$0xff]
        %v394 = vld [vmem:[%s252 + $0xa8] sm:$0xff]
        %v395 = vld [vmem:[%s252 + $0xb0] sm:$0xff]
        %v396 = vld [vmem:[%s252 + $0xb8] sm:$0xff]
        %v397 = vld [vmem:[%s252 + $0xc0] sm:$0xff]
        %v398 = vld [vmem:[%s252 + $0xc8] sm:$0xff]
        %v399 = vld [vmem:[%s252 + $0xd0] sm:$0xff]
        %v400 = vld [vmem:[%s252 + $0xd8] sm:$0xff]
        %v401 = vld [vmem:[%s252 + $0xe0] sm:$0xff]
        %v402 = vld [vmem:[%s252 + $0xe8] sm:$0xff]
        %v403 = vld [vmem:[%s252 + $0xf0] sm:$0xff]
        %v404 = vld [vmem:[%s252 + $0xf8] sm:$0xff]
        %v405 = vld [vmem:[%s252 + $0x100] sm:$0xff]
        %v406 = vld [vmem:[%s252 + $0x108] sm:$0xff]
        %v407 = vld [vmem:[%s252 + $0x110] sm:$0xff]
        %v408 = vld [vmem:[%s252 + $0x118] sm:$0xff]
        %v409 = vld [vmem:[%s252 + $0x120] sm:$0xff]
        %v410 = vld [vmem:[%s252 + $0x128] sm:$0xff]
        %v411 = vld [vmem:[%s252 + $0x130] sm:$0xff]
        %v412 = vld [vmem:[%s252 + $0x138] sm:$0xff]
        %v413 = vld [vmem:[%s252 + $0x140] sm:$0xff]
        %v414 = vld [vmem:[%s252 + $0x148] sm:$0xff]
        %v415 = vld [vmem:[%s252 + $0x150] sm:$0xff]
        %v416 = vld [vmem:[%s252 + $0x158] sm:$0xff]
        %v417 = vld [vmem:[%s252 + $0x160] sm:$0xff]
        %v418 = vld [vmem:[%s252 + $0x168] sm:$0xff]
        %v419 = vld [vmem:[%s252 + $0x170] sm:$0xff]
        %v420 = vld [vmem:[%s252 + $0x178] sm:$0xff]
        %v421 = vld [vmem:[%s252 + $0x180] sm:$0xff]
        %v422 = vld [vmem:[%s252 + $0x188] sm:$0xff]
        %v423 = vld [vmem:[%s252 + $0x190] sm:$0xff]
        %v424 = vld [vmem:[%s252 + $0x198] sm:$0xff]
        %v425 = vld [vmem:[%s252 + $0x1a0] sm:$0xff]
        %v426 = vld [vmem:[%s252 + $0x1a8] sm:$0xff]
        %v427 = vld [vmem:[%s252 + $0x1b0] sm:$0xff]
        %v428 = vld [vmem:[%s252 + $0x1b8] sm:$0xff]
        %v429 = vld [vmem:[%s252 + $0x1c0] sm:$0xff]
        %v430 = vld [vmem:[%s252 + $0x1c8] sm:$0xff]
        %v431 = vld [vmem:[%s252 + $0x1d0] sm:$0xff]
        %v432 = vld [vmem:[%s252 + $0x1d8] sm:$0xff]
        %v433 = vld [vmem:[%s252 + $0x1e0] sm:$0xff]
        %v434 = vld [vmem:[%s252 + $0x1e8] sm:$0xff]
        %v435 = vld [vmem:[%s252 + $0x1f0] sm:$0xff]
        %v436 = vld [vmem:[%s252 + $0x1f8] sm:$0xff]
        %v501 = vunpack.c.l.b16 %v373
        %v502 = vunpack.c.h.b16 %v373
        %v503 = vunpack.c.l.b16 %v374
        %v504 = vunpack.c.h.b16 %v374
        %v505 = vunpack.c.l.b16 %v375
        %v506 = vunpack.c.h.b16 %v375
        %v507 = vunpack.c.l.b16 %v376
        %v508 = vunpack.c.h.b16 %v376
        %v509 = vunpack.c.l.b16 %v377
        %v510 = vunpack.c.h.b16 %v377
        %v511 = vunpack.c.l.b16 %v378
        %v512 = vunpack.c.h.b16 %v378
        %v513 = vunpack.c.l.b16 %v379
        %v514 = vunpack.c.h.b16 %v379
        %v515 = vunpack.c.l.b16 %v380
        %v516 = vunpack.c.h.b16 %v380
        %v517 = vunpack.c.l.b16 %v381
        %v518 = vunpack.c.h.b16 %v381
        %v519 = vunpack.c.l.b16 %v382
        %v520 = vunpack.c.h.b16 %v382
        %v521 = vunpack.c.l.b16 %v383
        %v522 = vunpack.c.h.b16 %v383
        %v523 = vunpack.c.l.b16 %v384
        %v524 = vunpack.c.h.b16 %v384
        %v525 = vunpack.c.l.b16 %v385
        %v526 = vunpack.c.h.b16 %v385
        %v527 = vunpack.c.l.b16 %v386
        %v528 = vunpack.c.h.b16 %v386
        %v529 = vunpack.c.l.b16 %v387
        %v530 = vunpack.c.h.b16 %v387
        %v531 = vunpack.c.l.b16 %v388
        %v532 = vunpack.c.h.b16 %v388
        %v533 = vunpack.c.l.b16 %v389
        %v534 = vunpack.c.h.b16 %v389
        %v535 = vunpack.c.l.b16 %v390
        %v536 = vunpack.c.h.b16 %v390
        %v537 = vunpack.c.l.b16 %v391
        %v538 = vunpack.c.h.b16 %v391
        %v539 = vunpack.c.l.b16 %v392
        %v540 = vunpack.c.h.b16 %v392
        %v541 = vunpack.c.l.b16 %v393
        %v542 = vunpack.c.h.b16 %v393
        %v543 = vunpack.c.l.b16 %v394
        %v544 = vunpack.c.h.b16 %v394
        %v545 = vunpack.c.l.b16 %v395
        %v546 = vunpack.c.h.b16 %v395
        %v547 = vunpack.c.l.b16 %v396
        %v548 = vunpack.c.h.b16 %v396
        %v549 = vunpack.c.l.b16 %v397
        %v550 = vunpack.c.h.b16 %v397
        %v551 = vunpack.c.l.b16 %v398
        %v552 = vunpack.c.h.b16 %v398
        %v553 = vunpack.c.l.b16 %v399
        %v554 = vunpack.c.h.b16 %v399
        %v555 = vunpack.c.l.b16 %v400
        %v556 = vunpack.c.h.b16 %v400
        %v557 = vunpack.c.l.b16 %v401
        %v558 = vunpack.c.h.b16 %v401
        %v559 = vunpack.c.l.b16 %v402
        %v560 = vunpack.c.h.b16 %v402
        %v561 = vunpack.c.l.b16 %v403
        %v562 = vunpack.c.h.b16 %v403
        %v563 = vunpack.c.l.b16 %v404
        %v564 = vunpack.c.h.b16 %v404
        %v565 = vunpack.c.l.b16 %v405
        %v566 = vunpack.c.h.b16 %v405
        %v567 = vunpack.c.l.b16 %v406
        %v568 = vunpack.c.h.b16 %v406
        %v569 = vunpack.c.l.b16 %v407
        %v570 = vunpack.c.h.b16 %v407
        %v571 = vunpack.c.l.b16 %v408
        %v572 = vunpack.c.h.b16 %v408
        %v573 = vunpack.c.l.b16 %v409
        %v574 = vunpack.c.h.b16 %v409
        %v575 = vunpack.c.l.b16 %v410
        %v576 = vunpack.c.h.b16 %v410
        %v577 = vunpack.c.l.b16 %v411
        %v578 = vunpack.c.h.b16 %v411
        %v579 = vunpack.c.l.b16 %v412
        %v580 = vunpack.c.h.b16 %v412
        %v581 = vunpack.c.l.b16 %v413
        %v582 = vunpack.c.h.b16 %v413
        %v583 = vunpack.c.l.b16 %v414
        %v584 = vunpack.c.h.b16 %v414
        %v585 = vunpack.c.l.b16 %v415
        %v586 = vunpack.c.h.b16 %v415
        %v587 = vunpack.c.l.b16 %v416
        %v588 = vunpack.c.h.b16 %v416
        %v589 = vunpack.c.l.b16 %v417
        %v590 = vunpack.c.h.b16 %v417
        %v591 = vunpack.c.l.b16 %v418
        %v592 = vunpack.c.h.b16 %v418
        %v593 = vunpack.c.l.b16 %v419
        %v594 = vunpack.c.h.b16 %v419
        %v595 = vunpack.c.l.b16 %v420
        %v596 = vunpack.c.h.b16 %v420
        %v597 = vunpack.c.l.b16 %v421
        %v598 = vunpack.c.h.b16 %v421
        %v599 = vunpack.c.l.b16 %v422
        %v600 = vunpack.c.h.b16 %v422
        %v601 = vunpack.c.l.b16 %v423
        %v602 = vunpack.c.h.b16 %v423
        %v603 = vunpack.c.l.b16 %v424
        %v604 = vunpack.c.h.b16 %v424
        %v605 = vunpack.c.l.b16 %v425
        %v606 = vunpack.c.h.b16 %v425
        %v607 = vunpack.c.l.b16 %v426
        %v608 = vunpack.c.h.b16 %v426
        %v609 = vunpack.c.l.b16 %v427
        %v610 = vunpack.c.h.b16 %v427
        %v611 = vunpack.c.l.b16 %v428
        %v612 = vunpack.c.h.b16 %v428
        %v613 = vunpack.c.l.b16 %v429
        %v614 = vunpack.c.h.b16 %v429
        %v615 = vunpack.c.l.b16 %v430
        %v616 = vunpack.c.h.b16 %v430
        %v617 = vunpack.c.l.b16 %v431
        %v618 = vunpack.c.h.b16 %v431
        %v619 = vunpack.c.l.b16 %v432
        %v620 = vunpack.c.h.b16 %v432
        %v621 = vunpack.c.l.b16 %v433
        %v622 = vunpack.c.h.b16 %v433
        %v623 = vunpack.c.l.b16 %v434
        %v624 = vunpack.c.h.b16 %v434
        %v625 = vunpack.c.l.b16 %v435
        %v626 = vunpack.c.h.b16 %v435
        %v627 = vunpack.c.l.b16 %v436
        %v628 = vunpack.c.h.b16 %v436
        %v629 = vpack.c.b16 %v505, %v501
        %v630 = vpack.c.b16 %v506, %v502
        %v631 = vpack.c.b16 %v507, %v503
        %v632 = vpack.c.b16 %v508, %v504
        %v633 = vpack.c.b16 %v513, %v509
        %v634 = vpack.c.b16 %v514, %v510
        %v635 = vpack.c.b16 %v515, %v511
        %v636 = vpack.c.b16 %v516, %v512
        %v637 = vpack.c.b16 %v521, %v517
        %v638 = vpack.c.b16 %v522, %v518
        %v639 = vpack.c.b16 %v523, %v519
        %v640 = vpack.c.b16 %v524, %v520
        %v641 = vpack.c.b16 %v529, %v525
        %v642 = vpack.c.b16 %v530, %v526
        %v643 = vpack.c.b16 %v531, %v527
        %v644 = vpack.c.b16 %v532, %v528
        %v645 = vpack.c.b16 %v537, %v533
        %v646 = vpack.c.b16 %v538, %v534
        %v647 = vpack.c.b16 %v539, %v535
        %v648 = vpack.c.b16 %v540, %v536
        %v649 = vpack.c.b16 %v545, %v541
        %v650 = vpack.c.b16 %v546, %v542
        %v651 = vpack.c.b16 %v547, %v543
        %v652 = vpack.c.b16 %v548, %v544
        %v653 = vpack.c.b16 %v553, %v549
        %v654 = vpack.c.b16 %v554, %v550
        %v655 = vpack.c.b16 %v555, %v551
        %v656 = vpack.c.b16 %v556, %v552
        %v657 = vpack.c.b16 %v561, %v557
        %v658 = vpack.c.b16 %v562, %v558
        %v659 = vpack.c.b16 %v563, %v559
        %v660 = vpack.c.b16 %v564, %v560
        %v661 = vpack.c.b16 %v569, %v565
        %v662 = vpack.c.b16 %v570, %v566
        %v663 = vpack.c.b16 %v571, %v567
        %v664 = vpack.c.b16 %v572, %v568
        %v665 = vpack.c.b16 %v577, %v573
        %v666 = vpack.c.b16 %v578, %v574
        %v667 = vpack.c.b16 %v579, %v575
        %v668 = vpack.c.b16 %v580, %v576
        %v669 = vpack.c.b16 %v585, %v581
        %v670 = vpack.c.b16 %v586, %v582
        %v671 = vpack.c.b16 %v587, %v583
        %v672 = vpack.c.b16 %v588, %v584
        %v673 = vpack.c.b16 %v593, %v589
        %v674 = vpack.c.b16 %v594, %v590
        %v675 = vpack.c.b16 %v595, %v591
        %v676 = vpack.c.b16 %v596, %v592
        %v677 = vpack.c.b16 %v601, %v597
        %v678 = vpack.c.b16 %v602, %v598
        %v679 = vpack.c.b16 %v603, %v599
        %v680 = vpack.c.b16 %v604, %v600
        %v681 = vpack.c.b16 %v609, %v605
        %v682 = vpack.c.b16 %v610, %v606
        %v683 = vpack.c.b16 %v611, %v607
        %v684 = vpack.c.b16 %v612, %v608
        %v685 = vpack.c.b16 %v617, %v613
        %v686 = vpack.c.b16 %v618, %v614
        %v687 = vpack.c.b16 %v619, %v615
        %v688 = vpack.c.b16 %v620, %v616
        %v689 = vpack.c.b16 %v625, %v621
        %v690 = vpack.c.b16 %v626, %v622
        %v691 = vpack.c.b16 %v627, %v623
        %v692 = vpack.c.b16 %v628, %v624
        %v821 = vunpack.c.l.b16 %v309
        %v822 = vunpack.c.l.b16 %v310
        %v823 = vunpack.c.l.b16 %v311
        %v824 = vunpack.c.l.b16 %v312
        %v825 = vunpack.c.l.b16 %v313
        %v826 = vunpack.c.l.b16 %v314
        %v827 = vunpack.c.l.b16 %v315
        %v828 = vunpack.c.l.b16 %v316
        %v829 = vunpack.c.l.b16 %v317
        %v830 = vunpack.c.l.b16 %v318
        %v831 = vunpack.c.l.b16 %v319
        %v832 = vunpack.c.l.b16 %v320
        %v833 = vunpack.c.l.b16 %v321
        %v834 = vunpack.c.l.b16 %v322
        %v835 = vunpack.c.l.b16 %v323
        %v836 = vunpack.c.l.b16 %v324
        %v837 = vunpack.c.l.b16 %v325
        %v838 = vunpack.c.l.b16 %v326
        %v839 = vunpack.c.l.b16 %v327
        %v840 = vunpack.c.l.b16 %v328
        %v841 = vunpack.c.l.b16 %v329
        %v842 = vunpack.c.l.b16 %v330
        %v843 = vunpack.c.l.b16 %v331
        %v844 = vunpack.c.l.b16 %v332
        %v845 = vunpack.c.l.b16 %v333
        %v846 = vunpack.c.l.b16 %v334
        %v847 = vunpack.c.l.b16 %v335
        %v848 = vunpack.c.l.b16 %v336
        %v849 = vunpack.c.l.b16 %v337
        %v850 = vunpack.c.l.b16 %v338
        %v851 = vunpack.c.l.b16 %v339
        %v852 = vunpack.c.l.b16 %v340
        %v853 = vunpack.c.l.b16 %v341
        %v854 = vunpack.c.l.b16 %v342
        %v855 = vunpack.c.l.b16 %v343
        %v856 = vunpack.c.l.b16 %v344
        %v857 = vunpack.c.l.b16 %v345
        %v858 = vunpack.c.l.b16 %v346
        %v859 = vunpack.c.l.b16 %v347
        %v860 = vunpack.c.l.b16 %v348
        %v861 = vunpack.c.l.b16 %v349
        %v862 = vunpack.c.l.b16 %v350
        %v863 = vunpack.c.l.b16 %v351
        %v864 = vunpack.c.l.b16 %v352
        %v865 = vunpack.c.l.b16 %v353
        %v866 = vunpack.c.l.b16 %v354
        %v867 = vunpack.c.l.b16 %v355
        %v868 = vunpack.c.l.b16 %v356
        %v869 = vunpack.c.l.b16 %v357
        %v870 = vunpack.c.l.b16 %v358
        %v871 = vunpack.c.l.b16 %v359
        %v872 = vunpack.c.l.b16 %v360
        %v873 = vunpack.c.l.b16 %v361
        %v874 = vunpack.c.l.b16 %v362
        %v875 = vunpack.c.l.b16 %v363
        %v876 = vunpack.c.l.b16 %v364
        %v877 = vunpack.c.l.b16 %v365
        %v878 = vunpack.c.l.b16 %v366
        %v879 = vunpack.c.l.b16 %v367
        %v880 = vunpack.c.l.b16 %v368
        %v881 = vunpack.c.l.b16 %v369
        %v882 = vunpack.c.l.b16 %v370
        %v883 = vunpack.c.l.b16 %v371
        %v884 = vunpack.c.l.b16 %v372
        %v885 = vpack.c.b16 %v822, %v821
        %v886 = vpack.c.b16 %v824, %v823
        %v887 = vpack.c.b16 %v826, %v825
        %v888 = vpack.c.b16 %v828, %v827
        %v889 = vpack.c.b16 %v830, %v829
        %v890 = vpack.c.b16 %v832, %v831
        %v891 = vpack.c.b16 %v834, %v833
        %v892 = vpack.c.b16 %v836, %v835
        %v893 = vpack.c.b16 %v838, %v837
        %v894 = vpack.c.b16 %v840, %v839
        %v895 = vpack.c.b16 %v842, %v841
        %v896 = vpack.c.b16 %v844, %v843
        %v897 = vpack.c.b16 %v846, %v845
        %v898 = vpack.c.b16 %v848, %v847
        %v899 = vpack.c.b16 %v850, %v849
        %v900 = vpack.c.b16 %v852, %v851
        %v901 = vpack.c.b16 %v854, %v853
        %v902 = vpack.c.b16 %v856, %v855
        %v903 = vpack.c.b16 %v858, %v857
        %v904 = vpack.c.b16 %v860, %v859
        %v905 = vpack.c.b16 %v862, %v861
        %v906 = vpack.c.b16 %v864, %v863
        %v907 = vpack.c.b16 %v866, %v865
        %v908 = vpack.c.b16 %v868, %v867
        %v909 = vpack.c.b16 %v870, %v869
        %v910 = vpack.c.b16 %v872, %v871
        %v911 = vpack.c.b16 %v874, %v873
        %v912 = vpack.c.b16 %v876, %v875
        %v913 = vpack.c.b16 %v878, %v877
        %v914 = vpack.c.b16 %v880, %v879
        %v915 = vpack.c.b16 %v882, %v881
        %v916 = vpack.c.b16 %v884, %v883
        %949 = vmatprep.subr.bf16.mxu0 0
        %950 = vmatpush1.bf16.msra.mxu0 %v892
        %951 = vmatprep.subr.bf16.mxu0 0
        %952 = vmatpush1.bf16.msra.mxu0 %v891
        %953 = vmatprep.subr.bf16.mxu0 0
        %954 = vmatpush1.bf16.msra.mxu0 %v890
        %955 = vmatprep.subr.bf16.mxu0 0
        %956 = vmatpush1.bf16.msra.mxu0 %v889
        %957 = vmatprep.subr.bf16.mxu0 0
        %958 = vmatpush1.bf16.msra.mxu0 %v888
        %959 = vmatprep.subr.bf16.mxu0 0
        %960 = vmatpush1.bf16.msra.mxu0 %v887
        %961 = vmatprep.subr.bf16.mxu0 0
        %962 = vmatpush1.bf16.msra.mxu0 %v886
        %963 = vmatprep.subr.bf16.mxu0 0
        %964 = vmatpush1.bf16.msra.mxu0 %v885
        %965 = vmatprep.subr.bf16.mxu0 0
        %966 = vmatpush2.bf16.msra.mxu0 %v900
        %967 = vmatprep.subr.bf16.mxu0 0
        %968 = vmatpush2.bf16.msra.mxu0 %v899
        %969 = vmatprep.subr.bf16.mxu0 0
        %970 = vmatpush2.bf16.msra.mxu0 %v898
        %971 = vmatprep.subr.bf16.mxu0 0
        %972 = vmatpush2.bf16.msra.mxu0 %v897
        %973 = vmatprep.subr.bf16.mxu0 0
        %974 = vmatpush2.bf16.msra.mxu0 %v896
        %975 = vmatprep.subr.bf16.mxu0 0
        %976 = vmatpush2.bf16.msra.mxu0 %v895
        %977 = vmatprep.subr.bf16.mxu0 0
        %978 = vmatpush2.bf16.msra.mxu0 %v894
        %979 = vmatprep.subr.bf16.mxu0 0
        %980 = vmatpush2.bf16.msra.mxu0 %v893
        %981 = vmatprep.mubr.bf16.mxu0 %v630
        %982 = vmatmul.mubr.bf16.gmra.mxu0 %v629
        %v983 = vpop.f32.mrf.mxu0
        %v984 = vadd.f32 0.0, %v983
        %v985 = vpop.f32.mrf.mxu0
        %v986 = vpop.f32.mrf.mxu0
        %v987 = vadd.f32 0.0, %v986
        %v988 = vpop.f32.mrf.mxu0
        %989 = vmatprep.mubr.bf16.mxu0 %v634
        %990 = vmatmul.mubr.bf16.gmra.mxu0 %v633
        %v991 = vpop.f32.mrf.mxu0
        %v992 = vadd.f32 0.0, %v991
        %v993 = vpop.f32.mrf.mxu0
        %v994 = vpop.f32.mrf.mxu0
        %v995 = vadd.f32 0.0, %v994
        %v996 = vpop.f32.mrf.mxu0
        %997 = vmatprep.mubr.bf16.mxu0 %v638
        %998 = vmatmul.mubr.bf16.gmra.mxu0 %v637
        %v999 = vpop.f32.mrf.mxu0
        %v1000 = vadd.f32 0.0, %v999
        %v1001 = vpop.f32.mrf.mxu0
        %v1002 = vpop.f32.mrf.mxu0
        %v1003 = vadd.f32 0.0, %v1002
        %v1004 = vpop.f32.mrf.mxu0
        %1005 = vmatprep.mubr.bf16.mxu0 %v642
        %1006 = vmatmul.mubr.bf16.gmra.mxu0 %v641
        %v1007 = vpop.f32.mrf.mxu0
        %v1008 = vadd.f32 0.0, %v1007
        %v1009 = vpop.f32.mrf.mxu0
        %v1010 = vpop.f32.mrf.mxu0
        %v1011 = vadd.f32 0.0, %v1010
        %v1012 = vpop.f32.mrf.mxu0
        %1013 = vmatprep.mubr.bf16.mxu0 %v646
        %1014 = vmatmul.mubr.bf16.gmra.mxu0 %v645
        %v1015 = vpop.f32.mrf.mxu0
        %v1016 = vadd.f32 0.0, %v1015
        %v1017 = vpop.f32.mrf.mxu0
        %v1018 = vpop.f32.mrf.mxu0
        %v1019 = vadd.f32 0.0, %v1018
        %v1020 = vpop.f32.mrf.mxu0
        %1021 = vmatprep.mubr.bf16.mxu0 %v650
        %1022 = vmatmul.mubr.bf16.gmra.mxu0 %v649
        %v1023 = vpop.f32.mrf.mxu0
        %v1024 = vadd.f32 0.0, %v1023
        %v1025 = vpop.f32.mrf.mxu0
        %v1026 = vpop.f32.mrf.mxu0
        %v1027 = vadd.f32 0.0, %v1026
        %v1028 = vpop.f32.mrf.mxu0
        %1029 = vmatprep.mubr.bf16.mxu0 %v654
        %1030 = vmatmul.mubr.bf16.gmra.mxu0 %v653
        %v1031 = vpop.f32.mrf.mxu0
        %v1032 = vadd.f32 0.0, %v1031
        %v1033 = vpop.f32.mrf.mxu0
        %v1034 = vpop.f32.mrf.mxu0
        %v1035 = vadd.f32 0.0, %v1034
        %v1036 = vpop.f32.mrf.mxu0
        %1037 = vmatprep.mubr.bf16.mxu0 %v658
        %1038 = vmatmul.mubr.bf16.gmra.mxu0 %v657
        %v1039 = vpop.f32.mrf.mxu0
        %v1040 = vadd.f32 0.0, %v1039
        %v1041 = vpop.f32.mrf.mxu0
        %v1042 = vpop.f32.mrf.mxu0
        %v1043 = vadd.f32 0.0, %v1042
        %v1044 = vpop.f32.mrf.mxu0
        %1045 = vmatprep.mubr.bf16.mxu0 %v662
        %1046 = vmatmul.mubr.bf16.gmra.mxu0 %v661
        %v1047 = vpop.f32.mrf.mxu0
        %v1048 = vadd.f32 0.0, %v1047
        %v1049 = vpop.f32.mrf.mxu0
        %v1050 = vpop.f32.mrf.mxu0
        %v1051 = vadd.f32 0.0, %v1050
        %v1052 = vpop.f32.mrf.mxu0
        %1053 = vmatprep.mubr.bf16.mxu0 %v666
        %1054 = vmatmul.mubr.bf16.gmra.mxu0 %v665
        %v1055 = vpop.f32.mrf.mxu0
        %v1056 = vadd.f32 0.0, %v1055
        %v1057 = vpop.f32.mrf.mxu0
        %v1058 = vpop.f32.mrf.mxu0
        %v1059 = vadd.f32 0.0, %v1058
        %v1060 = vpop.f32.mrf.mxu0
        %1061 = vmatprep.mubr.bf16.mxu0 %v670
        %1062 = vmatmul.mubr.bf16.gmra.mxu0 %v669
        %v1063 = vpop.f32.mrf.mxu0
        %v1064 = vadd.f32 0.0, %v1063
        %v1065 = vpop.f32.mrf.mxu0
        %v1066 = vpop.f32.mrf.mxu0
        %v1067 = vadd.f32 0.0, %v1066
        %v1068 = vpop.f32.mrf.mxu0
        %1069 = vmatprep.mubr.bf16.mxu0 %v674
        %1070 = vmatmul.mubr.bf16.gmra.mxu0 %v673
        %v1071 = vpop.f32.mrf.mxu0
        %v1072 = vadd.f32 0.0, %v1071
        %v1073 = vpop.f32.mrf.mxu0
        %v1074 = vpop.f32.mrf.mxu0
        %v1075 = vadd.f32 0.0, %v1074
        %v1076 = vpop.f32.mrf.mxu0
        %1077 = vmatprep.mubr.bf16.mxu0 %v678
        %1078 = vmatmul.mubr.bf16.gmra.mxu0 %v677
        %v1079 = vpop.f32.mrf.mxu0
        %v1080 = vadd.f32 0.0, %v1079
        %v1081 = vpop.f32.mrf.mxu0
        %v1082 = vpop.f32.mrf.mxu0
        %v1083 = vadd.f32 0.0, %v1082
        %v1084 = vpop.f32.mrf.mxu0
        %1085 = vmatprep.mubr.bf16.mxu0 %v682
        %1086 = vmatmul.mubr.bf16.gmra.mxu0 %v681
        %v1087 = vpop.f32.mrf.mxu0
        %v1088 = vadd.f32 0.0, %v1087
        %v1089 = vpop.f32.mrf.mxu0
        %v1090 = vpop.f32.mrf.mxu0
        %v1091 = vadd.f32 0.0, %v1090
        %v1092 = vpop.f32.mrf.mxu0
        %1093 = vmatprep.mubr.bf16.mxu0 %v686
        %1094 = vmatmul.mubr.bf16.gmra.mxu0 %v685
        %v1095 = vpop.f32.mrf.mxu0
        %v1096 = vadd.f32 0.0, %v1095
        %v1097 = vpop.f32.mrf.mxu0
        %v1098 = vpop.f32.mrf.mxu0
        %v1099 = vadd.f32 0.0, %v1098
        %v1100 = vpop.f32.mrf.mxu0
        %1101 = vmatprep.mubr.bf16.mxu0 %v690
        %1102 = vmatmul.mubr.bf16.gmra.mxu0 %v689
        %v1103 = vpop.f32.mrf.mxu0
        %v1104 = vadd.f32 0.0, %v1103
        %v1105 = vpop.f32.mrf.mxu0
        %v1106 = vpop.f32.mrf.mxu0
        %v1107 = vadd.f32 0.0, %v1106
        %v1108 = vpop.f32.mrf.mxu0
        %1109 = vdwg.mxu0
        %1110 = vmatprep.subr.bf16.mxu0 0
        %1111 = vmatpush1.bf16.msra.mxu0 %v908
        %1112 = vmatprep.subr.bf16.mxu0 0
        %1113 = vmatpush1.bf16.msra.mxu0 %v907
        %1114 = vmatprep.subr.bf16.mxu0 0
        %1115 = vmatpush1.bf16.msra.mxu0 %v906
        %1116 = vmatprep.subr.bf16.mxu0 0
        %1117 = vmatpush1.bf16.msra.mxu0 %v905
        %1118 = vmatprep.subr.bf16.mxu0 0
        %1119 = vmatpush1.bf16.msra.mxu0 %v904
        %1120 = vmatprep.subr.bf16.mxu0 0
        %1121 = vmatpush1.bf16.msra.mxu0 %v903
        %1122 = vmatprep.subr.bf16.mxu0 0
        %1123 = vmatpush1.bf16.msra.mxu0 %v902
        %1124 = vmatprep.subr.bf16.mxu0 0
        %1125 = vmatpush1.bf16.msra.mxu0 %v901
        %1126 = vmatprep.subr.bf16.mxu0 0
        %1127 = vmatpush2.bf16.msra.mxu0 %v916
        %1128 = vmatprep.subr.bf16.mxu0 0
        %1129 = vmatpush2.bf16.msra.mxu0 %v915
        %1130 = vmatprep.subr.bf16.mxu0 0
        %1131 = vmatpush2.bf16.msra.mxu0 %v914
        %1132 = vmatprep.subr.bf16.mxu0 0
        %1133 = vmatpush2.bf16.msra.mxu0 %v913
        %1134 = vmatprep.subr.bf16.mxu0 0
        %1135 = vmatpush2.bf16.msra.mxu0 %v912
        %1136 = vmatprep.subr.bf16.mxu0 0
        %1137 = vmatpush2.bf16.msra.mxu0 %v911
        %1138 = vmatprep.subr.bf16.mxu0 0
        %1139 = vmatpush2.bf16.msra.mxu0 %v910
        %1140 = vmatprep.subr.bf16.mxu0 0
        %1141 = vmatpush2.bf16.msra.mxu0 %v909
        %1142 = vmatprep.mubr.bf16.mxu0 %v632
        %1143 = vmatmul.mubr.bf16.gmra.mxu0 %v631
        %v1144 = vpop.f32.mrf.mxu0
        %v1145 = vadd.f32 %v984, %v1144
        %v1146 = vpop.f32.mrf.mxu0
        %v1147 = vpop.f32.mrf.mxu0
        %v1148 = vadd.f32 %v987, %v1147
        %v1149 = vpop.f32.mrf.mxu0
        %1150 = vmatprep.mubr.bf16.mxu0 %v636
        %1151 = vmatmul.mubr.bf16.gmra.mxu0 %v635
        %v1152 = vpop.f32.mrf.mxu0
        %v1153 = vadd.f32 %v992, %v1152
        %v1154 = vpop.f32.mrf.mxu0
        %v1155 = vpop.f32.mrf.mxu0
        %v1156 = vadd.f32 %v995, %v1155
        %v1157 = vpop.f32.mrf.mxu0
        %1158 = vmatprep.mubr.bf16.mxu0 %v640
        %1159 = vmatmul.mubr.bf16.gmra.mxu0 %v639
        %v1160 = vpop.f32.mrf.mxu0
        %v1161 = vadd.f32 %v1000, %v1160
        %v1162 = vpop.f32.mrf.mxu0
        %v1163 = vpop.f32.mrf.mxu0
        %v1164 = vadd.f32 %v1003, %v1163
        %v1165 = vpop.f32.mrf.mxu0
        %1166 = vmatprep.mubr.bf16.mxu0 %v644
        %1167 = vmatmul.mubr.bf16.gmra.mxu0 %v643
        %v1168 = vpop.f32.mrf.mxu0
        %v1169 = vadd.f32 %v1008, %v1168
        %v1170 = vpop.f32.mrf.mxu0
        %v1171 = vpop.f32.mrf.mxu0
        %v1172 = vadd.f32 %v1011, %v1171
        %v1173 = vpop.f32.mrf.mxu0
        %1174 = vmatprep.mubr.bf16.mxu0 %v648
        %1175 = vmatmul.mubr.bf16.gmra.mxu0 %v647
        %v1176 = vpop.f32.mrf.mxu0
        %v1177 = vadd.f32 %v1016, %v1176
        %v1178 = vpop.f32.mrf.mxu0
        %v1179 = vpop.f32.mrf.mxu0
        %v1180 = vadd.f32 %v1019, %v1179
        %v1181 = vpop.f32.mrf.mxu0
        %1182 = vmatprep.mubr.bf16.mxu0 %v652
        %1183 = vmatmul.mubr.bf16.gmra.mxu0 %v651
        %v1184 = vpop.f32.mrf.mxu0
        %v1185 = vadd.f32 %v1024, %v1184
        %v1186 = vpop.f32.mrf.mxu0
        %v1187 = vpop.f32.mrf.mxu0
        %v1188 = vadd.f32 %v1027, %v1187
        %v1189 = vpop.f32.mrf.mxu0
        %1190 = vmatprep.mubr.bf16.mxu0 %v656
        %1191 = vmatmul.mubr.bf16.gmra.mxu0 %v655
        %v1192 = vpop.f32.mrf.mxu0
        %v1193 = vadd.f32 %v1032, %v1192
        %v1194 = vpop.f32.mrf.mxu0
        %v1195 = vpop.f32.mrf.mxu0
        %v1196 = vadd.f32 %v1035, %v1195
        %v1197 = vpop.f32.mrf.mxu0
        %1198 = vmatprep.mubr.bf16.mxu0 %v660
        %1199 = vmatmul.mubr.bf16.gmra.mxu0 %v659
        %v1200 = vpop.f32.mrf.mxu0
        %v1201 = vadd.f32 %v1040, %v1200
        %v1202 = vpop.f32.mrf.mxu0
        %v1203 = vpop.f32.mrf.mxu0
        %v1204 = vadd.f32 %v1043, %v1203
        %v1205 = vpop.f32.mrf.mxu0
        %1206 = vmatprep.mubr.bf16.mxu0 %v664
        %1207 = vmatmul.mubr.bf16.gmra.mxu0 %v663
        %v1208 = vpop.f32.mrf.mxu0
        %v1209 = vadd.f32 %v1048, %v1208
        %v1210 = vpop.f32.mrf.mxu0
        %v1211 = vpop.f32.mrf.mxu0
        %v1212 = vadd.f32 %v1051, %v1211
        %v1213 = vpop.f32.mrf.mxu0
        %1214 = vmatprep.mubr.bf16.mxu0 %v668
        %1215 = vmatmul.mubr.bf16.gmra.mxu0 %v667
        %v1216 = vpop.f32.mrf.mxu0
        %v1217 = vadd.f32 %v1056, %v1216
        %v1218 = vpop.f32.mrf.mxu0
        %v1219 = vpop.f32.mrf.mxu0
        %v1220 = vadd.f32 %v1059, %v1219
        %v1221 = vpop.f32.mrf.mxu0
        %1222 = vmatprep.mubr.bf16.mxu0 %v672
        %1223 = vmatmul.mubr.bf16.gmra.mxu0 %v671
        %v1224 = vpop.f32.mrf.mxu0
        %v1225 = vadd.f32 %v1064, %v1224
        %v1226 = vpop.f32.mrf.mxu0
        %v1227 = vpop.f32.mrf.mxu0
        %v1228 = vadd.f32 %v1067, %v1227
        %v1229 = vpop.f32.mrf.mxu0
        %1230 = vmatprep.mubr.bf16.mxu0 %v676
        %1231 = vmatmul.mubr.bf16.gmra.mxu0 %v675
        %v1232 = vpop.f32.mrf.mxu0
        %v1233 = vadd.f32 %v1072, %v1232
        %v1234 = vpop.f32.mrf.mxu0
        %v1235 = vpop.f32.mrf.mxu0
        %v1236 = vadd.f32 %v1075, %v1235
        %v1237 = vpop.f32.mrf.mxu0
        %1238 = vmatprep.mubr.bf16.mxu0 %v680
        %1239 = vmatmul.mubr.bf16.gmra.mxu0 %v679
        %v1240 = vpop.f32.mrf.mxu0
        %v1241 = vadd.f32 %v1080, %v1240
        %v1242 = vpop.f32.mrf.mxu0
        %v1243 = vpop.f32.mrf.mxu0
        %v1244 = vadd.f32 %v1083, %v1243
        %v1245 = vpop.f32.mrf.mxu0
        %1246 = vmatprep.mubr.bf16.mxu0 %v684
        %1247 = vmatmul.mubr.bf16.gmra.mxu0 %v683
        %v1248 = vpop.f32.mrf.mxu0
        %v1249 = vadd.f32 %v1088, %v1248
        %v1250 = vpop.f32.mrf.mxu0
        %v1251 = vpop.f32.mrf.mxu0
        %v1252 = vadd.f32 %v1091, %v1251
        %v1253 = vpop.f32.mrf.mxu0
        %1254 = vmatprep.mubr.bf16.mxu0 %v688
        %1255 = vmatmul.mubr.bf16.gmra.mxu0 %v687
        %v1256 = vpop.f32.mrf.mxu0
        %v1257 = vadd.f32 %v1096, %v1256
        %v1258 = vpop.f32.mrf.mxu0
        %v1259 = vpop.f32.mrf.mxu0
        %v1260 = vadd.f32 %v1099, %v1259
        %v1261 = vpop.f32.mrf.mxu0
        %1262 = vmatprep.mubr.bf16.mxu0 %v692
        %1263 = vmatmul.mubr.bf16.gmra.mxu0 %v691
        %v1264 = vpop.f32.mrf.mxu0
        %v1265 = vadd.f32 %v1104, %v1264
        %v1266 = vpop.f32.mrf.mxu0
        %v1267 = vpop.f32.mrf.mxu0
        %v1268 = vadd.f32 %v1107, %v1267
        %v1269 = vpop.f32.mrf.mxu0
        %1270 = vdwg.mxu0
        %p1271 = scmp.eq.s32.totalorder %s27, 0
        // Predicated region
        $region53: #{tpu_custom_call.1} parent=35 // pred_check
          %p1272 = pneg %p1271
        $region54: #{tpu_custom_call.1} parent=35 // pred_check_branch
          %1274 = sbr.rel (%p1272) target = $region56
        $region55: #{tpu_custom_call.1} parent=35 // pred_region
          %1275 = vst [vmem:[#allocation2] sm:$0xff] %v1145
          %1276 = vst [vmem:[#allocation2 + $0x8] sm:$0xff] %v1148
          %1277 = vst [vmem:[#allocation2 + $0x10] sm:$0xff] %v1153
          %1278 = vst [vmem:[#allocation2 + $0x18] sm:$0xff] %v1156
          %1279 = vst [vmem:[#allocation2 + $0x20] sm:$0xff] %v1161
          %1280 = vst [vmem:[#allocation2 + $0x28] sm:$0xff] %v1164
          %1281 = vst [vmem:[#allocation2 + $0x30] sm:$0xff] %v1169
          %1282 = vst [vmem:[#allocation2 + $0x38] sm:$0xff] %v1172
          %1283 = vst [vmem:[#allocation2 + $0x40] sm:$0xff] %v1177
          %1284 = vst [vmem:[#allocation2 + $0x48] sm:$0xff] %v1180
          %1285 = vst [vmem:[#allocation2 + $0x50] sm:$0xff] %v1185
          %1286 = vst [vmem:[#allocation2 + $0x58] sm:$0xff] %v1188
          %1287 = vst [vmem:[#allocation2 + $0x60] sm:$0xff] %v1193
          %1288 = vst [vmem:[#allocation2 + $0x68] sm:$0xff] %v1196
          %1289 = vst [vmem:[#allocation2 + $0x70] sm:$0xff] %v1201
          %1290 = vst [vmem:[#allocation2 + $0x78] sm:$0xff] %v1204
          %1291 = vst [vmem:[#allocation2 + $0x80] sm:$0xff] %v1209
          %1292 = vst [vmem:[#allocation2 + $0x88] sm:$0xff] %v1212
          %1293 = vst [vmem:[#allocation2 + $0x90] sm:$0xff] %v1217
          %1294 = vst [vmem:[#allocation2 + $0x98] sm:$0xff] %v1220
          %1295 = vst [vmem:[#allocation2 + $0xa0] sm:$0xff] %v1225
          %1296 = vst [vmem:[#allocation2 + $0xa8] sm:$0xff] %v1228
          %1297 = vst [vmem:[#allocation2 + $0xb0] sm:$0xff] %v1233
          %1298 = vst [vmem:[#allocation2 + $0xb8] sm:$0xff] %v1236
          %1299 = vst [vmem:[#allocation2 + $0xc0] sm:$0xff] %v1241
          %1300 = vst [vmem:[#allocation2 + $0xc8] sm:$0xff] %v1244
          %1301 = vst [vmem:[#allocation2 + $0xd0] sm:$0xff] %v1249
          %1302 = vst [vmem:[#allocation2 + $0xd8] sm:$0xff] %v1252
          %1303 = vst [vmem:[#allocation2 + $0xe0] sm:$0xff] %v1257
          %1304 = vst [vmem:[#allocation2 + $0xe8] sm:$0xff] %v1260
          %1305 = vst [vmem:[#allocation2 + $0xf0] sm:$0xff] %v1265
          %1306 = vst [vmem:[#allocation2 + $0xf8] sm:$0xff] %v1268
        $region56: #{tpu_custom_call.1} parent=35 // pred_fallthru
          _
        %p1307 = scmp.gt.s32.totalorder %s27, 0
        // Predicated region
        $region57: #{tpu_custom_call.1} parent=35 // pred_check
          %p1308 = pneg %p1307
        $region58: #{tpu_custom_call.1} parent=35 // pred_check_branch
          %1310 = sbr.rel (%p1308) target = $region60
        $region59: #{tpu_custom_call.1} parent=35 // pred_region
          %v1311 = vld [vmem:[#allocation2] sm:$0xff]
          %v1312 = vld [vmem:[#allocation2 + $0x8] sm:$0xff]
          %v1313 = vld [vmem:[#allocation2 + $0x10] sm:$0xff]
          %v1314 = vld [vmem:[#allocation2 + $0x18] sm:$0xff]
          %v1315 = vld [vmem:[#allocation2 + $0x20] sm:$0xff]
          %v1316 = vld [vmem:[#allocation2 + $0x28] sm:$0xff]
          %v1317 = vld [vmem:[#allocation2 + $0x30] sm:$0xff]
          %v1318 = vld [vmem:[#allocation2 + $0x38] sm:$0xff]
          %v1319 = vld [vmem:[#allocation2 + $0x40] sm:$0xff]
          %v1320 = vld [vmem:[#allocation2 + $0x48] sm:$0xff]
          %v1321 = vld [vmem:[#allocation2 + $0x50] sm:$0xff]
          %v1322 = vld [vmem:[#allocation2 + $0x58] sm:$0xff]
          %v1323 = vld [vmem:[#allocation2 + $0x60] sm:$0xff]
          %v1324 = vld [vmem:[#allocation2 + $0x68] sm:$0xff]
          %v1325 = vld [vmem:[#allocation2 + $0x70] sm:$0xff]
          %v1326 = vld [vmem:[#allocation2 + $0x78] sm:$0xff]
          %v1327 = vld [vmem:[#allocation2 + $0x80] sm:$0xff]
          %v1328 = vld [vmem:[#allocation2 + $0x88] sm:$0xff]
          %v1329 = vld [vmem:[#allocation2 + $0x90] sm:$0xff]
          %v1330 = vld [vmem:[#allocation2 + $0x98] sm:$0xff]
          %v1331 = vld [vmem:[#allocation2 + $0xa0] sm:$0xff]
          %v1332 = vld [vmem:[#allocation2 + $0xa8] sm:$0xff]
          %v1333 = vld [vmem:[#allocation2 + $0xb0] sm:$0xff]
          %v1334 = vld [vmem:[#allocation2 + $0xb8] sm:$0xff]
          %v1335 = vld [vmem:[#allocation2 + $0xc0] sm:$0xff]
          %v1336 = vld [vmem:[#allocation2 + $0xc8] sm:$0xff]
          %v1337 = vld [vmem:[#allocation2 + $0xd0] sm:$0xff]
          %v1338 = vld [vmem:[#allocation2 + $0xd8] sm:$0xff]
          %v1339 = vld [vmem:[#allocation2 + $0xe0] sm:$0xff]
          %v1340 = vld [vmem:[#allocation2 + $0xe8] sm:$0xff]
          %v1341 = vld [vmem:[#allocation2 + $0xf0] sm:$0xff]
          %v1342 = vld [vmem:[#allocation2 + $0xf8] sm:$0xff]
          %v1343 = vadd.f32 %v1311, %v1145
          %v1344 = vadd.f32 %v1312, %v1148
          %v1345 = vadd.f32 %v1313, %v1153
          %v1346 = vadd.f32 %v1314, %v1156
          %v1347 = vadd.f32 %v1315, %v1161
          %v1348 = vadd.f32 %v1316, %v1164
          %v1349 = vadd.f32 %v1317, %v1169
          %v1350 = vadd.f32 %v1318, %v1172
          %v1351 = vadd.f32 %v1319, %v1177
          %v1352 = vadd.f32 %v1320, %v1180
          %v1353 = vadd.f32 %v1321, %v1185
          %v1354 = vadd.f32 %v1322, %v1188
          %v1355 = vadd.f32 %v1323, %v1193
          %v1356 = vadd.f32 %v1324, %v1196
          %v1357 = vadd.f32 %v1325, %v1201
          %v1358 = vadd.f32 %v1326, %v1204
          %v1359 = vadd.f32 %v1327, %v1209
          %v1360 = vadd.f32 %v1328, %v1212
          %v1361 = vadd.f32 %v1329, %v1217
          %v1362 = vadd.f32 %v1330, %v1220
          %v1363 = vadd.f32 %v1331, %v1225
          %v1364 = vadd.f32 %v1332, %v1228
          %v1365 = vadd.f32 %v1333, %v1233
          %v1366 = vadd.f32 %v1334, %v1236
          %v1367 = vadd.f32 %v1335, %v1241
          %v1368 = vadd.f32 %v1336, %v1244
          %v1369 = vadd.f32 %v1337, %v1249
          %v1370 = vadd.f32 %v1338, %v1252
          %v1371 = vadd.f32 %v1339, %v1257
          %v1372 = vadd.f32 %v1340, %v1260
          %v1373 = vadd.f32 %v1341, %v1265
          %v1374 = vadd.f32 %v1342, %v1268
          %1375 = vst [vmem:[#allocation2] sm:$0xff] %v1343
          %1376 = vst [vmem:[#allocation2 + $0x8] sm:$0xff] %v1344
          %1377 = vst [vmem:[#allocation2 + $0x10] sm:$0xff] %v1345
          %1378 = vst [vmem:[#allocation2 + $0x18] sm:$0xff] %v1346
          %1379 = vst [vmem:[#allocation2 + $0x20] sm:$0xff] %v1347
          %1380 = vst [vmem:[#allocation2 + $0x28] sm:$0xff] %v1348
          %1381 = vst [vmem:[#allocation2 + $0x30] sm:$0xff] %v1349
          %1382 = vst [vmem:[#allocation2 + $0x38] sm:$0xff] %v1350
          %1383 = vst [vmem:[#allocation2 + $0x40] sm:$0xff] %v1351
          %1384 = vst [vmem:[#allocation2 + $0x48] sm:$0xff] %v1352
          %1385 = vst [vmem:[#allocation2 + $0x50] sm:$0xff] %v1353
          %1386 = vst [vmem:[#allocation2 + $0x58] sm:$0xff] %v1354
          %1387 = vst [vmem:[#allocation2 + $0x60] sm:$0xff] %v1355
          %1388 = vst [vmem:[#allocation2 + $0x68] sm:$0xff] %v1356
          %1389 = vst [vmem:[#allocation2 + $0x70] sm:$0xff] %v1357
          %1390 = vst [vmem:[#allocation2 + $0x78] sm:$0xff] %v1358
          %1391 = vst [vmem:[#allocation2 + $0x80] sm:$0xff] %v1359
          %1392 = vst [vmem:[#allocation2 + $0x88] sm:$0xff] %v1360
          %1393 = vst [vmem:[#allocation2 + $0x90] sm:$0xff] %v1361
          %1394 = vst [vmem:[#allocation2 + $0x98] sm:$0xff] %v1362
          %1395 = vst [vmem:[#allocation2 + $0xa0] sm:$0xff] %v1363
          %1396 = vst [vmem:[#allocation2 + $0xa8] sm:$0xff] %v1364
          %1397 = vst [vmem:[#allocation2 + $0xb0] sm:$0xff] %v1365
          %1398 = vst [vmem:[#allocation2 + $0xb8] sm:$0xff] %v1366
          %1399 = vst [vmem:[#allocation2 + $0xc0] sm:$0xff] %v1367
          %1400 = vst [vmem:[#allocation2 + $0xc8] sm:$0xff] %v1368
          %1401 = vst [vmem:[#allocation2 + $0xd0] sm:$0xff] %v1369
          %1402 = vst [vmem:[#allocation2 + $0xd8] sm:$0xff] %v1370
          %1403 = vst [vmem:[#allocation2 + $0xe0] sm:$0xff] %v1371
          %1404 = vst [vmem:[#allocation2 + $0xe8] sm:$0xff] %v1372
          %1405 = vst [vmem:[#allocation2 + $0xf0] sm:$0xff] %v1373
          %1406 = vst [vmem:[#allocation2 + $0xf8] sm:$0xff] %v1374
        $region60: #{tpu_custom_call.1} parent=35 // pred_fallthru
          _
        // Predicated region
        $region61: #{tpu_custom_call.1} parent=35 // pred_check
          %p1407 = pneg %p1271
        $region62: #{tpu_custom_call.1} parent=35 // pred_check_branch
          %1409 = sbr.rel (%p1407) target = $region64
        $region63: #{tpu_custom_call.1} parent=35 // pred_region
          %v1410 = vld [vmem:[#allocation2] sm:$0xff]
          %v1411 = vld [vmem:[#allocation2 + $0x8] sm:$0xff]
          %v1412 = vld [vmem:[#allocation2 + $0x10] sm:$0xff]
          %v1413 = vld [vmem:[#allocation2 + $0x18] sm:$0xff]
          %v1414 = vld [vmem:[#allocation2 + $0x20] sm:$0xff]
          %v1415 = vld [vmem:[#allocation2 + $0x28] sm:$0xff]
          %v1416 = vld [vmem:[#allocation2 + $0x30] sm:$0xff]
          %v1417 = vld [vmem:[#allocation2 + $0x38] sm:$0xff]
          %v1418 = vld [vmem:[#allocation2 + $0x40] sm:$0xff]
          %v1419 = vld [vmem:[#allocation2 + $0x48] sm:$0xff]
          %v1420 = vld [vmem:[#allocation2 + $0x50] sm:$0xff]
          %v1421 = vld [vmem:[#allocation2 + $0x58] sm:$0xff]
          %v1422 = vld [vmem:[#allocation2 + $0x60] sm:$0xff]
          %v1423 = vld [vmem:[#allocation2 + $0x68] sm:$0xff]
          %v1424 = vld [vmem:[#allocation2 + $0x70] sm:$0xff]
          %v1425 = vld [vmem:[#allocation2 + $0x78] sm:$0xff]
          %v1426 = vld [vmem:[#allocation2 + $0x80] sm:$0xff]
          %v1427 = vld [vmem:[#allocation2 + $0x88] sm:$0xff]
          %v1428 = vld [vmem:[#allocation2 + $0x90] sm:$0xff]
          %v1429 = vld [vmem:[#allocation2 + $0x98] sm:$0xff]
          %v1430 = vld [vmem:[#allocation2 + $0xa0] sm:$0xff]
          %v1431 = vld [vmem:[#allocation2 + $0xa8] sm:$0xff]
          %v1432 = vld [vmem:[#allocation2 + $0xb0] sm:$0xff]
          %v1433 = vld [vmem:[#allocation2 + $0xb8] sm:$0xff]
          %v1434 = vld [vmem:[#allocation2 + $0xc0] sm:$0xff]
          %v1435 = vld [vmem:[#allocation2 + $0xc8] sm:$0xff]
          %v1436 = vld [vmem:[#allocation2 + $0xd0] sm:$0xff]
          %v1437 = vld [vmem:[#allocation2 + $0xd8] sm:$0xff]
          %v1438 = vld [vmem:[#allocation2 + $0xe0] sm:$0xff]
          %v1439 = vld [vmem:[#allocation2 + $0xe8] sm:$0xff]
          %v1440 = vld [vmem:[#allocation2 + $0xf0] sm:$0xff]
          %v1441 = vld [vmem:[#allocation2 + $0xf8] sm:$0xff]
          %v1442 = vld [vmem:[%s265] sm:$0xff]
          %v1443 = vld [vmem:[%s265 + $0x8] sm:$0xff]
          %v1444 = vld [vmem:[%s265 + $0x10] sm:$0xff]
          %v1445 = vld [vmem:[%s265 + $0x18] sm:$0xff]
          %v1446 = vld [vmem:[%s265 + $0x20] sm:$0xff]
          %v1447 = vld [vmem:[%s265 + $0x28] sm:$0xff]
          %v1448 = vld [vmem:[%s265 + $0x30] sm:$0xff]
          %v1449 = vld [vmem:[%s265 + $0x38] sm:$0xff]
          %v1450 = vld [vmem:[%s265 + $0x40] sm:$0xff]
          %v1451 = vld [vmem:[%s265 + $0x48] sm:$0xff]
          %v1452 = vld [vmem:[%s265 + $0x50] sm:$0xff]
          %v1453 = vld [vmem:[%s265 + $0x58] sm:$0xff]
          %v1454 = vld [vmem:[%s265 + $0x60] sm:$0xff]
          %v1455 = vld [vmem:[%s265 + $0x68] sm:$0xff]
          %v1456 = vld [vmem:[%s265 + $0x70] sm:$0xff]
          %v1457 = vld [vmem:[%s265 + $0x78] sm:$0xff]
          %v1458 = vld [vmem:[%s265 + $0x80] sm:$0xff]
          %v1459 = vld [vmem:[%s265 + $0x88] sm:$0xff]
          %v1460 = vld [vmem:[%s265 + $0x90] sm:$0xff]
          %v1461 = vld [vmem:[%s265 + $0x98] sm:$0xff]
          %v1462 = vld [vmem:[%s265 + $0xa0] sm:$0xff]
          %v1463 = vld [vmem:[%s265 + $0xa8] sm:$0xff]
          %v1464 = vld [vmem:[%s265 + $0xb0] sm:$0xff]
          %v1465 = vld [vmem:[%s265 + $0xb8] sm:$0xff]
          %v1466 = vld [vmem:[%s265 + $0xc0] sm:$0xff]
          %v1467 = vld [vmem:[%s265 + $0xc8] sm:$0xff]
          %v1468 = vld [vmem:[%s265 + $0xd0] sm:$0xff]
          %v1469 = vld [vmem:[%s265 + $0xd8] sm:$0xff]
          %v1470 = vld [vmem:[%s265 + $0xe0] sm:$0xff]
          %v1471 = vld [vmem:[%s265 + $0xe8] sm:$0xff]
          %v1472 = vld [vmem:[%s265 + $0xf0] sm:$0xff]
          %v1473 = vld [vmem:[%s265 + $0xf8] sm:$0xff]
          %v1474 = vmul.f32 %v1410, 0.9
          %v1475 = vmul.f32 %v1411, 0.9
          %v1476 = vmul.f32 %v1412, 0.9
          %v1477 = vmul.f32 %v1413, 0.9
          %v1478 = vmul.f32 %v1414, 0.9
          %v1479 = vmul.f32 %v1415, 0.9
          %v1480 = vmul.f32 %v1416, 0.9
          %v1481 = vmul.f32 %v1417, 0.9
          %v1482 = vmul.f32 %v1418, 0.9
          %v1483 = vmul.f32 %v1419, 0.9
          %v1484 = vmul.f32 %v1420, 0.9
          %v1485 = vmul.f32 %v1421, 0.9
          %v1486 = vmul.f32 %v1422, 0.9
          %v1487 = vmul.f32 %v1423, 0.9
          %v1488 = vmul.f32 %v1424, 0.9
          %v1489 = vmul.f32 %v1425, 0.9
          %v1490 = vmul.f32 %v1426, 0.9
          %v1491 = vmul.f32 %v1427, 0.9
          %v1492 = vmul.f32 %v1428, 0.9
          %v1493 = vmul.f32 %v1429, 0.9
          %v1494 = vmul.f32 %v1430, 0.9
          %v1495 = vmul.f32 %v1431, 0.9
          %v1496 = vmul.f32 %v1432, 0.9
          %v1497 = vmul.f32 %v1433, 0.9
          %v1498 = vmul.f32 %v1434, 0.9
          %v1499 = vmul.f32 %v1435, 0.9
          %v1500 = vmul.f32 %v1436, 0.9
          %v1501 = vmul.f32 %v1437, 0.9
          %v1502 = vmul.f32 %v1438, 0.9
          %v1503 = vmul.f32 %v1439, 0.9
          %v1504 = vmul.f32 %v1440, 0.9
          %v1505 = vmul.f32 %v1441, 0.9
          %v1506 = vmul.f32 %v1442, 0.1
          %v1507 = vmul.f32 %v1443, 0.1
          %v1508 = vmul.f32 %v1444, 0.1
          %v1509 = vmul.f32 %v1445, 0.1
          %v1510 = vmul.f32 %v1446, 0.1
          %v1511 = vmul.f32 %v1447, 0.1
          %v1512 = vmul.f32 %v1448, 0.1
          %v1513 = vmul.f32 %v1449, 0.1
          %v1514 = vmul.f32 %v1450, 0.1
          %v1515 = vmul.f32 %v1451, 0.1
          %v1516 = vmul.f32 %v1452, 0.1
          %v1517 = vmul.f32 %v1453, 0.1
          %v1518 = vmul.f32 %v1454, 0.1
          %v1519 = vmul.f32 %v1455, 0.1
          %v1520 = vmul.f32 %v1456, 0.1
          %v1521 = vmul.f32 %v1457, 0.1
          %v1522 = vmul.f32 %v1458, 0.1
          %v1523 = vmul.f32 %v1459, 0.1
          %v1524 = vmul.f32 %v1460, 0.1
          %v1525 = vmul.f32 %v1461, 0.1
          %v1526 = vmul.f32 %v1462, 0.1
          %v1527 = vmul.f32 %v1463, 0.1
          %v1528 = vmul.f32 %v1464, 0.1
          %v1529 = vmul.f32 %v1465, 0.1
          %v1530 = vmul.f32 %v1466, 0.1
          %v1531 = vmul.f32 %v1467, 0.1
          %v1532 = vmul.f32 %v1468, 0.1
          %v1533 = vmul.f32 %v1469, 0.1
          %v1534 = vmul.f32 %v1470, 0.1
          %v1535 = vmul.f32 %v1471, 0.1
          %v1536 = vmul.f32 %v1472, 0.1
          %v1537 = vmul.f32 %v1473, 0.1
          %v1538 = vadd.f32 %v1474, %v1506
          %v1539 = vadd.f32 %v1475, %v1507
          %v1540 = vadd.f32 %v1476, %v1508
          %v1541 = vadd.f32 %v1477, %v1509
          %v1542 = vadd.f32 %v1478, %v1510
          %v1543 = vadd.f32 %v1479, %v1511
          %v1544 = vadd.f32 %v1480, %v1512
          %v1545 = vadd.f32 %v1481, %v1513
          %v1546 = vadd.f32 %v1482, %v1514
          %v1547 = vadd.f32 %v1483, %v1515
          %v1548 = vadd.f32 %v1484, %v1516
          %v1549 = vadd.f32 %v1485, %v1517
          %v1550 = vadd.f32 %v1486, %v1518
          %v1551 = vadd.f32 %v1487, %v1519
          %v1552 = vadd.f32 %v1488, %v1520
          %v1553 = vadd.f32 %v1489, %v1521
          %v1554 = vadd.f32 %v1490, %v1522
          %v1555 = vadd.f32 %v1491, %v1523
          %v1556 = vadd.f32 %v1492, %v1524
          %v1557 = vadd.f32 %v1493, %v1525
          %v1558 = vadd.f32 %v1494, %v1526
          %v1559 = vadd.f32 %v1495, %v1527
          %v1560 = vadd.f32 %v1496, %v1528
          %v1561 = vadd.f32 %v1497, %v1529
          %v1562 = vadd.f32 %v1498, %v1530
          %v1563 = vadd.f32 %v1499, %v1531
          %v1564 = vadd.f32 %v1500, %v1532
          %v1565 = vadd.f32 %v1501, %v1533
          %v1566 = vadd.f32 %v1502, %v1534
          %v1567 = vadd.f32 %v1503, %v1535
          %v1568 = vadd.f32 %v1504, %v1536
          %v1569 = vadd.f32 %v1505, %v1537
          %v1570 = vpack.c.bf16 %v1539, %v1538
          %v1571 = vpack.c.bf16 %v1541, %v1540
          %v1572 = vpack.c.bf16 %v1543, %v1542
          %v1573 = vpack.c.bf16 %v1545, %v1544
          %v1574 = vpack.c.bf16 %v1547, %v1546
          %v1575 = vpack.c.bf16 %v1549, %v1548
          %v1576 = vpack.c.bf16 %v1551, %v1550
          %v1577 = vpack.c.bf16 %v1553, %v1552
          %v1578 = vpack.c.bf16 %v1555, %v1554
          %v1579 = vpack.c.bf16 %v1557, %v1556
          %v1580 = vpack.c.bf16 %v1559, %v1558
          %v1581 = vpack.c.bf16 %v1561, %v1560
          %v1582 = vpack.c.bf16 %v1563, %v1562
          %v1583 = vpack.c.bf16 %v1565, %v1564
          %v1584 = vpack.c.bf16 %v1567, %v1566
          %v1585 = vpack.c.bf16 %v1569, %v1568
          %v1586 = vld [vmem:[#allocation9] sm:$0xf]
          %v1587 = vld [vmem:[#allocation9 + $0x4] sm:$0xf]
          %v1588 = vld [vmem:[#allocation9 + $0x8] sm:$0xf]
          %v1589 = vld [vmem:[#allocation9 + $0xc] sm:$0xf]
          %v1590 = vld [vmem:[#allocation9 + $0x10] sm:$0xf]
          %v1591 = vld [vmem:[#allocation9 + $0x14] sm:$0xf]
          %v1592 = vld [vmem:[#allocation9 + $0x18] sm:$0xf]
          %v1593 = vld [vmem:[#allocation9 + $0x1c] sm:$0xf]
          %v1594 = vld [vmem:[#allocation9 + $0x20] sm:$0xf]
          %v1595 = vld [vmem:[#allocation9 + $0x24] sm:$0xf]
          %v1596 = vld [vmem:[#allocation9 + $0x28] sm:$0xf]
          %v1597 = vld [vmem:[#allocation9 + $0x2c] sm:$0xf]
          %v1598 = vld [vmem:[#allocation9 + $0x30] sm:$0xf]
          %v1599 = vld [vmem:[#allocation9 + $0x34] sm:$0xf]
          %v1600 = vld [vmem:[#allocation9 + $0x38] sm:$0xf]
          %v1601 = vld [vmem:[#allocation9 + $0x3c] sm:$0xf]
          %v1618 = vunpack.c.l.b16 %v1586
          %v1619 = vunpack.c.l.b16 %v1587
          %v1620 = vunpack.c.l.b16 %v1588
          %v1621 = vunpack.c.l.b16 %v1589
          %v1622 = vunpack.c.l.b16 %v1590
          %v1623 = vunpack.c.l.b16 %v1591
          %v1624 = vunpack.c.l.b16 %v1592
          %v1625 = vunpack.c.l.b16 %v1593
          %v1626 = vunpack.c.l.b16 %v1594
          %v1627 = vunpack.c.l.b16 %v1595
          %v1628 = vunpack.c.l.b16 %v1596
          %v1629 = vunpack.c.l.b16 %v1597
          %v1630 = vunpack.c.l.b16 %v1598
          %v1631 = vunpack.c.l.b16 %v1599
          %v1632 = vunpack.c.l.b16 %v1600
          %v1633 = vunpack.c.l.b16 %v1601
          %v1634 = vpack.c.b16 %v1619, %v1618
          %v1635 = vpack.c.b16 %v1621, %v1620
          %v1636 = vpack.c.b16 %v1623, %v1622
          %v1637 = vpack.c.b16 %v1625, %v1624
          %v1638 = vpack.c.b16 %v1627, %v1626
          %v1639 = vpack.c.b16 %v1629, %v1628
          %v1640 = vpack.c.b16 %v1631, %v1630
          %v1641 = vpack.c.b16 %v1633, %v1632
          %1650 = vmatprep.subr.bf16.mxu0 0
          %1651 = vmatpush1.bf16.msra.mxu0 %v1641
          %1652 = vmatprep.subr.bf16.mxu0 0
          %1653 = vmatpush1.bf16.msra.mxu0 %v1640
          %1654 = vmatprep.subr.bf16.mxu0 0
          %1655 = vmatpush1.bf16.msra.mxu0 %v1639
          %1656 = vmatprep.subr.bf16.mxu0 0
          %1657 = vmatpush1.bf16.msra.mxu0 %v1638
          %1658 = vmatprep.subr.bf16.mxu0 0
          %1659 = vmatpush1.bf16.msra.mxu0 %v1637
          %1660 = vmatprep.subr.bf16.mxu0 0
          %1661 = vmatpush1.bf16.msra.mxu0 %v1636
          %1662 = vmatprep.subr.bf16.mxu0 0
          %1663 = vmatpush1.bf16.msra.mxu0 %v1635
          %1664 = vmatprep.subr.bf16.mxu0 0
          %1665 = vmatpush1.bf16.msra.mxu0 %v1634
          %1666 = vmatprep.subr.bf16.mxu0 0
          %1667 = vmatpush2.bf16.msra.mxu0 0
          %1668 = vmatprep.subr.bf16.mxu0 0
          %1669 = vmatpush2.bf16.msra.mxu0 0
          %1670 = vmatprep.subr.bf16.mxu0 0
          %1671 = vmatpush2.bf16.msra.mxu0 0
          %1672 = vmatprep.subr.bf16.mxu0 0
          %1673 = vmatpush2.bf16.msra.mxu0 0
          %1674 = vmatprep.subr.bf16.mxu0 0
          %1675 = vmatpush2.bf16.msra.mxu0 0
          %1676 = vmatprep.subr.bf16.mxu0 0
          %1677 = vmatpush2.bf16.msra.mxu0 0
          %1678 = vmatprep.subr.bf16.mxu0 0
          %1679 = vmatpush2.bf16.msra.mxu0 0
          %1680 = vmatprep.subr.bf16.mxu0 0
          %1681 = vmatpush2.bf16.msra.mxu0 0
          %1682 = vmatprep.mubr.bf16.mxu0 0
          %1683 = vmatmul.mubr.bf16.gmra.mxu0 %v1570
          %v1684 = vpop.f32.mrf.mxu0
          %v1685 = vadd.f32 0.0, %v1684
          %v1686 = vpop.f32.mrf.mxu0
          %v1687 = vpop.f32.mrf.mxu0
          %v1688 = vadd.f32 0.0, %v1687
          %v1689 = vpop.f32.mrf.mxu0
          %1690 = vmatprep.mubr.bf16.mxu0 0
          %1691 = vmatmul.mubr.bf16.gmra.mxu0 %v1571
          %v1692 = vpop.f32.mrf.mxu0
          %v1693 = vadd.f32 0.0, %v1692
          %v1694 = vpop.f32.mrf.mxu0
          %v1695 = vpop.f32.mrf.mxu0
          %v1696 = vadd.f32 0.0, %v1695
          %v1697 = vpop.f32.mrf.mxu0
          %1698 = vmatprep.mubr.bf16.mxu0 0
          %1699 = vmatmul.mubr.bf16.gmra.mxu0 %v1572
          %v1700 = vpop.f32.mrf.mxu0
          %v1701 = vadd.f32 0.0, %v1700
          %v1702 = vpop.f32.mrf.mxu0
          %v1703 = vpop.f32.mrf.mxu0
          %v1704 = vadd.f32 0.0, %v1703
          %v1705 = vpop.f32.mrf.mxu0
          %1706 = vmatprep.mubr.bf16.mxu0 0
          %1707 = vmatmul.mubr.bf16.gmra.mxu0 %v1573
          %v1708 = vpop.f32.mrf.mxu0
          %v1709 = vadd.f32 0.0, %v1708
          %v1710 = vpop.f32.mrf.mxu0
          %v1711 = vpop.f32.mrf.mxu0
          %v1712 = vadd.f32 0.0, %v1711
          %v1713 = vpop.f32.mrf.mxu0
          %1714 = vmatprep.mubr.bf16.mxu0 0
          %1715 = vmatmul.mubr.bf16.gmra.mxu0 %v1574
          %v1716 = vpop.f32.mrf.mxu0
          %v1717 = vadd.f32 0.0, %v1716
          %v1718 = vpop.f32.mrf.mxu0
          %v1719 = vpop.f32.mrf.mxu0
          %v1720 = vadd.f32 0.0, %v1719
          %v1721 = vpop.f32.mrf.mxu0
          %1722 = vmatprep.mubr.bf16.mxu0 0
          %1723 = vmatmul.mubr.bf16.gmra.mxu0 %v1575
          %v1724 = vpop.f32.mrf.mxu0
          %v1725 = vadd.f32 0.0, %v1724
          %v1726 = vpop.f32.mrf.mxu0
          %v1727 = vpop.f32.mrf.mxu0
          %v1728 = vadd.f32 0.0, %v1727
          %v1729 = vpop.f32.mrf.mxu0
          %1730 = vmatprep.mubr.bf16.mxu0 0
          %1731 = vmatmul.mubr.bf16.gmra.mxu0 %v1576
          %v1732 = vpop.f32.mrf.mxu0
          %v1733 = vadd.f32 0.0, %v1732
          %v1734 = vpop.f32.mrf.mxu0
          %v1735 = vpop.f32.mrf.mxu0
          %v1736 = vadd.f32 0.0, %v1735
          %v1737 = vpop.f32.mrf.mxu0
          %1738 = vmatprep.mubr.bf16.mxu0 0
          %1739 = vmatmul.mubr.bf16.gmra.mxu0 %v1577
          %v1740 = vpop.f32.mrf.mxu0
          %v1741 = vadd.f32 0.0, %v1740
          %v1742 = vpop.f32.mrf.mxu0
          %v1743 = vpop.f32.mrf.mxu0
          %v1744 = vadd.f32 0.0, %v1743
          %v1745 = vpop.f32.mrf.mxu0
          %1746 = vmatprep.mubr.bf16.mxu0 0
          %1747 = vmatmul.mubr.bf16.gmra.mxu0 %v1578
          %v1748 = vpop.f32.mrf.mxu0
          %v1749 = vadd.f32 0.0, %v1748
          %v1750 = vpop.f32.mrf.mxu0
          %v1751 = vpop.f32.mrf.mxu0
          %v1752 = vadd.f32 0.0, %v1751
          %v1753 = vpop.f32.mrf.mxu0
          %1754 = vmatprep.mubr.bf16.mxu0 0
          %1755 = vmatmul.mubr.bf16.gmra.mxu0 %v1579
          %v1756 = vpop.f32.mrf.mxu0
          %v1757 = vadd.f32 0.0, %v1756
          %v1758 = vpop.f32.mrf.mxu0
          %v1759 = vpop.f32.mrf.mxu0
          %v1760 = vadd.f32 0.0, %v1759
          %v1761 = vpop.f32.mrf.mxu0
          %1762 = vmatprep.mubr.bf16.mxu0 0
          %1763 = vmatmul.mubr.bf16.gmra.mxu0 %v1580
          %v1764 = vpop.f32.mrf.mxu0
          %v1765 = vadd.f32 0.0, %v1764
          %v1766 = vpop.f32.mrf.mxu0
          %v1767 = vpop.f32.mrf.mxu0
          %v1768 = vadd.f32 0.0, %v1767
          %v1769 = vpop.f32.mrf.mxu0
          %1770 = vmatprep.mubr.bf16.mxu0 0
          %1771 = vmatmul.mubr.bf16.gmra.mxu0 %v1581
          %v1772 = vpop.f32.mrf.mxu0
          %v1773 = vadd.f32 0.0, %v1772
          %v1774 = vpop.f32.mrf.mxu0
          %v1775 = vpop.f32.mrf.mxu0
          %v1776 = vadd.f32 0.0, %v1775
          %v1777 = vpop.f32.mrf.mxu0
          %1778 = vmatprep.mubr.bf16.mxu0 0
          %1779 = vmatmul.mubr.bf16.gmra.mxu0 %v1582
          %v1780 = vpop.f32.mrf.mxu0
          %v1781 = vadd.f32 0.0, %v1780
          %v1782 = vpop.f32.mrf.mxu0
          %v1783 = vpop.f32.mrf.mxu0
          %v1784 = vadd.f32 0.0, %v1783
          %v1785 = vpop.f32.mrf.mxu0
          %1786 = vmatprep.mubr.bf16.mxu0 0
          %1787 = vmatmul.mubr.bf16.gmra.mxu0 %v1583
          %v1788 = vpop.f32.mrf.mxu0
          %v1789 = vadd.f32 0.0, %v1788
          %v1790 = vpop.f32.mrf.mxu0
          %v1791 = vpop.f32.mrf.mxu0
          %v1792 = vadd.f32 0.0, %v1791
          %v1793 = vpop.f32.mrf.mxu0
          %1794 = vmatprep.mubr.bf16.mxu0 0
          %1795 = vmatmul.mubr.bf16.gmra.mxu0 %v1584
          %v1796 = vpop.f32.mrf.mxu0
          %v1797 = vadd.f32 0.0, %v1796
          %v1798 = vpop.f32.mrf.mxu0
          %v1799 = vpop.f32.mrf.mxu0
          %v1800 = vadd.f32 0.0, %v1799
          %v1801 = vpop.f32.mrf.mxu0
          %1802 = vmatprep.mubr.bf16.mxu0 0
          %1803 = vmatmul.mubr.bf16.gmra.mxu0 %v1585
          %v1804 = vpop.f32.mrf.mxu0
          %v1805 = vadd.f32 0.0, %v1804
          %v1806 = vpop.f32.mrf.mxu0
          %v1807 = vpop.f32.mrf.mxu0
          %v1808 = vadd.f32 0.0, %v1807
          %v1809 = vpop.f32.mrf.mxu0
          %1810 = vdwg.mxu0
          %v1811 = vmul.f32 %v1685, 0.4054651
          %v1812 = vmul.f32 %v1688, 0.4054651
          %v1813 = vmul.f32 %v1693, 0.4054651
          %v1814 = vmul.f32 %v1696, 0.4054651
          %v1815 = vmul.f32 %v1701, 0.4054651
          %v1816 = vmul.f32 %v1704, 0.4054651
          %v1817 = vmul.f32 %v1709, 0.4054651
          %v1818 = vmul.f32 %v1712, 0.4054651
          %v1819 = vmul.f32 %v1717, 0.4054651
          %v1820 = vmul.f32 %v1720, 0.4054651
          %v1821 = vmul.f32 %v1725, 0.4054651
          %v1822 = vmul.f32 %v1728, 0.4054651
          %v1823 = vmul.f32 %v1733, 0.4054651
          %v1824 = vmul.f32 %v1736, 0.4054651
          %v1825 = vmul.f32 %v1741, 0.4054651
          %v1826 = vmul.f32 %v1744, 0.4054651
          %v1827 = vmul.f32 %v1749, 0.4054651
          %v1828 = vmul.f32 %v1752, 0.4054651
          %v1829 = vmul.f32 %v1757, 0.4054651
          %v1830 = vmul.f32 %v1760, 0.4054651
          %v1831 = vmul.f32 %v1765, 0.4054651
          %v1832 = vmul.f32 %v1768, 0.4054651
          %v1833 = vmul.f32 %v1773, 0.4054651
          %v1834 = vmul.f32 %v1776, 0.4054651
          %v1835 = vmul.f32 %v1781, 0.4054651
          %v1836 = vmul.f32 %v1784, 0.4054651
          %v1837 = vmul.f32 %v1789, 0.4054651
          %v1838 = vmul.f32 %v1792, 0.4054651
          %v1839 = vmul.f32 %v1797, 0.4054651
          %v1840 = vmul.f32 %v1800, 0.4054651
          %v1841 = vmul.f32 %v1805, 0.4054651
          %v1842 = vmul.f32 %v1808, 0.4054651
          %v1843 = vmul.f32 %v1538, 0.5945349
          %v1844 = vmul.f32 %v1539, 0.5945349
          %v1845 = vmul.f32 %v1540, 0.5945349
          %v1846 = vmul.f32 %v1541, 0.5945349
          %v1847 = vmul.f32 %v1542, 0.5945349
          %v1848 = vmul.f32 %v1543, 0.5945349
          %v1849 = vmul.f32 %v1544, 0.5945349
          %v1850 = vmul.f32 %v1545, 0.5945349
          %v1851 = vmul.f32 %v1546, 0.5945349
          %v1852 = vmul.f32 %v1547, 0.5945349
          %v1853 = vmul.f32 %v1548, 0.5945349
          %v1854 = vmul.f32 %v1549, 0.5945349
          %v1855 = vmul.f32 %v1550, 0.5945349
          %v1856 = vmul.f32 %v1551, 0.5945349
          %v1857 = vmul.f32 %v1552, 0.5945349
          %v1858 = vmul.f32 %v1553, 0.5945349
          %v1859 = vmul.f32 %v1554, 0.5945349
          %v1860 = vmul.f32 %v1555, 0.5945349
          %v1861 = vmul.f32 %v1556, 0.5945349
          %v1862 = vmul.f32 %v1557, 0.5945349
          %v1863 = vmul.f32 %v1558, 0.5945349
          %v1864 = vmul.f32 %v1559, 0.5945349
          %v1865 = vmul.f32 %v1560, 0.5945349
          %v1866 = vmul.f32 %v1561, 0.5945349
          %v1867 = vmul.f32 %v1562, 0.5945349
          %v1868 = vmul.f32 %v1563, 0.5945349
          %v1869 = vmul.f32 %v1564, 0.5945349
          %v1870 = vmul.f32 %v1565, 0.5945349
          %v1871 = vmul.f32 %v1566, 0.5945349
          %v1872 = vmul.f32 %v1567, 0.5945349
          %v1873 = vmul.f32 %v1568, 0.5945349
          %v1874 = vmul.f32 %v1569, 0.5945349
          %v1875 = vadd.f32 %v1811, %v1843
          %v1876 = vadd.f32 %v1812, %v1844
          %v1877 = vadd.f32 %v1813, %v1845
          %v1878 = vadd.f32 %v1814, %v1846
          %v1879 = vadd.f32 %v1815, %v1847
          %v1880 = vadd.f32 %v1816, %v1848
          %v1881 = vadd.f32 %v1817, %v1849
          %v1882 = vadd.f32 %v1818, %v1850
          %v1883 = vadd.f32 %v1819, %v1851
          %v1884 = vadd.f32 %v1820, %v1852
          %v1885 = vadd.f32 %v1821, %v1853
          %v1886 = vadd.f32 %v1822, %v1854
          %v1887 = vadd.f32 %v1823, %v1855
          %v1888 = vadd.f32 %v1824, %v1856
          %v1889 = vadd.f32 %v1825, %v1857
          %v1890 = vadd.f32 %v1826, %v1858
          %v1891 = vadd.f32 %v1827, %v1859
          %v1892 = vadd.f32 %v1828, %v1860
          %v1893 = vadd.f32 %v1829, %v1861
          %v1894 = vadd.f32 %v1830, %v1862
          %v1895 = vadd.f32 %v1831, %v1863
          %v1896 = vadd.f32 %v1832, %v1864
          %v1897 = vadd.f32 %v1833, %v1865
          %v1898 = vadd.f32 %v1834, %v1866
          %v1899 = vadd.f32 %v1835, %v1867
          %v1900 = vadd.f32 %v1836, %v1868
          %v1901 = vadd.f32 %v1837, %v1869
          %v1902 = vadd.f32 %v1838, %v1870
          %v1903 = vadd.f32 %v1839, %v1871
          %v1904 = vadd.f32 %v1840, %v1872
          %v1905 = vadd.f32 %v1841, %v1873
          %v1906 = vadd.f32 %v1842, %v1874
          %1907 = vst [vmem:[%s298] sm:$0xff] %v1875
          %1908 = vst [vmem:[%s298 + $0x8] sm:$0xff] %v1876
          %1909 = vst [vmem:[%s298 + $0x10] sm:$0xff] %v1877
          %1910 = vst [vmem:[%s298 + $0x18] sm:$0xff] %v1878
          %1911 = vst [vmem:[%s298 + $0x20] sm:$0xff] %v1879
          %1912 = vst [vmem:[%s298 + $0x28] sm:$0xff] %v1880
          %1913 = vst [vmem:[%s298 + $0x30] sm:$0xff] %v1881
          %1914 = vst [vmem:[%s298 + $0x38] sm:$0xff] %v1882
          %1915 = vst [vmem:[%s298 + $0x40] sm:$0xff] %v1883
          %1916 = vst [vmem:[%s298 + $0x48] sm:$0xff] %v1884
          %1917 = vst [vmem:[%s298 + $0x50] sm:$0xff] %v1885
          %1918 = vst [vmem:[%s298 + $0x58] sm:$0xff] %v1886
          %1919 = vst [vmem:[%s298 + $0x60] sm:$0xff] %v1887
          %1920 = vst [vmem:[%s298 + $0x68] sm:$0xff] %v1888
          %1921 = vst [vmem:[%s298 + $0x70] sm:$0xff] %v1889
          %1922 = vst [vmem:[%s298 + $0x78] sm:$0xff] %v1890
          %1923 = vst [vmem:[%s298 + $0x80] sm:$0xff] %v1891
          %1924 = vst [vmem:[%s298 + $0x88] sm:$0xff] %v1892
          %1925 = vst [vmem:[%s298 + $0x90] sm:$0xff] %v1893
          %1926 = vst [vmem:[%s298 + $0x98] sm:$0xff] %v1894
          %1927 = vst [vmem:[%s298 + $0xa0] sm:$0xff] %v1895
          %1928 = vst [vmem:[%s298 + $0xa8] sm:$0xff] %v1896
          %1929 = vst [vmem:[%s298 + $0xb0] sm:$0xff] %v1897
          %1930 = vst [vmem:[%s298 + $0xb8] sm:$0xff] %v1898
          %1931 = vst [vmem:[%s298 + $0xc0] sm:$0xff] %v1899
          %1932 = vst [vmem:[%s298 + $0xc8] sm:$0xff] %v1900
          %1933 = vst [vmem:[%s298 + $0xd0] sm:$0xff] %v1901
          %1934 = vst [vmem:[%s298 + $0xd8] sm:$0xff] %v1902
          %1935 = vst [vmem:[%s298 + $0xe0] sm:$0xff] %v1903
          %1936 = vst [vmem:[%s298 + $0xe8] sm:$0xff] %v1904
          %1937 = vst [vmem:[%s298 + $0xf0] sm:$0xff] %v1905
          %1938 = vst [vmem:[%s298 + $0xf8] sm:$0xff] %v1906
        $region64: #{tpu_custom_call.1} parent=35 // pred_fallthru
          _
        %s1939 = sand.u32 %s138, 1
        %s1940 = scalar_lea.sflag [#allocation5], %s1939
        %s1941 = sand.u32 %s138, 1
        %s1942 = smul.addr %s1941, 256
        %s1943 = scalar_lea.vmem [#allocation10], %s1942
        // Predicated region
        $region65: #{tpu_custom_call.1} parent=35 // pred_check
          %p1944 = pneg %p148
        $region66: #{tpu_custom_call.1} parent=35 // pred_check_branch
          %1946 = sbr.rel (%p1944) target = $region68
        $region67: #{tpu_custom_call.1} parent=35 // pred_region
          %s1947 = smul.u32 32, %s26
          %s1949 = ssub.s32 4096, 4096
          %1950 = vsyncadd %s1940, %s1949
          %s1951 = smul.addr %s1947, 128
          %s1952 = scalar_lea.hbm %s4, %s1951
          %s1953 = sshll.u32 %s1943, 4
          %s1954 = int_to_ptr.vmem [resolvable:$true] %s1953
          %1959 = dma.vmem_to_hbm [thread:$0]  %s1954, 4096, %s1952, %s1940, 128, 128, 8
        $region68: #{tpu_custom_call.1} parent=35 // pred_fallthru
          _
      $region36: #{tpu_custom_call.1} parent=5 // pred_fallthru
        _
      %p1960 = scmp.le.s32.totalorder 2, %s17
      // Predicated region
      $region69: #{tpu_custom_call.1} parent=5 // pred_check
        %p1961 = pneg %p1960
      $region70: #{tpu_custom_call.1} parent=5 // pred_check_branch
        %1963 = sbr.rel (%p1961) target = $region72
      $region71: #{tpu_custom_call.1} parent=5 // pred_region
        %s1964 = ssub.s32 %s17, 2
        // Predicated region
        $region73: #{tpu_custom_call.1} parent=71 // pred_check
          %p1965 = pneg %p154
        $region74: #{tpu_custom_call.1} parent=71 // pred_check_branch
          %1967 = sbr.rel (%p1965) target = $region76
        $region75: #{tpu_custom_call.1} parent=71 // pred_region
          %s1968 = sand.u32 %s139, 1
          %s1969 = scalar_lea.sflag [#allocation5], %s1968
          %s1970 = sand.u32 %s139, 1
          %s1971 = smul.addr %s1970, 256
          %s1972 = scalar_lea.vmem [#allocation10], %s1971
          %1973 = dma.done %s1969, 4096
        $region76: #{tpu_custom_call.1} parent=71 // pred_fallthru
          _
      $region72: #{tpu_custom_call.1} parent=5 // pred_fallthru
        _
    $region6: #{tpu_custom_call.1} parent=1 // loop_footer
      %s21 = sadd.s32 1, %s17
    $region7: #{tpu_custom_call.1} parent=1 // loop_footer_branch
      %16 = sbr.rel target = $region3
    $region8: #{tpu_custom_call.1} parent=1 // loop_exit
      _
    %1974 = vsyncpa [#allocation4], 1
    %s1975 = scalar_lea.sflag [#allocation4], 1
    %1976 = vsyncpa %s1975, 1
    %1977 = vsyncpa [#allocation7], 1
    %1978 = vsyncpa [#allocation5], 1
    %s1979 = scalar_lea.sflag [#allocation5], 1
    %1980 = vsyncpa %s1979, 1

</llo_original>
